<compile_context>
chip_gen: v7x
topology: tpu7x:2x2x1
jax: 0.10.0
libtpu: 0.0.40
codegen_flags: <defaults>
</compile_context>

<pallas_src>
import functools

import numpy as np
import jax
import jax.numpy as jnp
from jax import lax
from jax.experimental import pallas as pl
from jax.experimental.pallas import tpu as pltpu


def _sigmoid(v):
    # sigmoid(v) == 0.5 * (1 + tanh(0.5*v)): a single EUP op per element.
    return 0.5 * (jnp.tanh(0.5 * v) + 1.0)


def cbam_kernel(x_ref, dxm_ref, w1_ref, b1_ref, w2_ref, b2_ref, wsp_ref, bcv_ref,
                o_ref, pool_scr, apad_scr, mpad_scr, *, W, pad):
    Bt, C, HW = x_ref.shape
    K = 2 * pad + 1
    P = pad * W + pad                       # max |flat offset| of a 7x7 tap

    # ---- zero the halo columns of the padded spatial maps -------------------
    zero_halo = jnp.zeros((Bt, P), jnp.float32)
    apad_scr[:, 0:P] = zero_halo
    apad_scr[:, P + HW:P + HW + P] = zero_halo
    mpad_scr[:, 0:P] = zero_halo
    mpad_scr[:, P + HW:P + HW + P] = zero_halo

    # ---- pooling: channel columns (MLP input) + spatial maps (conv input) ---
    for b in range(Bt):
        xb = x_ref[b]                                              # (C, HW)
        pool_scr[:, b:b + 1] = jnp.mean(xb, axis=1, keepdims=True)       # avg pool
        pool_scr[:, Bt + b:Bt + b + 1] = jnp.max(xb, axis=1, keepdims=True)  # max pool
        apad_scr[b:b + 1, P:P + HW] = jnp.mean(xb, axis=0, keepdims=True)    # channel mean
        mpad_scr[b:b + 1, P:P + HW] = jnp.max(xb, axis=0, keepdims=True)     # channel max

    # ---- channel attention: shared MLP run ONCE over all 2*Bt pooled vectors
    pooled = pool_scr[...]                                         # (C, 2*Bt)
    h = jnp.dot(w1_ref[...], pooled,
                preferred_element_type=jnp.float32) + b1_ref[...]  # (hid, 2*Bt)
    h = jnp.maximum(h, 0.0)
    m = jnp.dot(w2_ref[...], h,
                preferred_element_type=jnp.float32) + b2_ref[...]  # (C, 2*Bt)
    ch_att = _sigmoid(m[:, :Bt] + m[:, Bt:])                       # (C, Bt)

    # ---- spatial attention: 7x7 'same' conv as 49 shifted-window FMAs -------
    col_masks = [dxm_ref[k:k + 1, :] for k in range(K)]            # (1, HW) each
    acc = jnp.zeros((Bt, HW), jnp.float32) + bcv_ref[0, 0]
    for dy in range(-pad, pad + 1):
        for dx in range(-pad, pad + 1):
            t = (dy + pad) * K + (dx + pad)
            lo = P + dy * W + dx
            win = (wsp_ref[0, t] * apad_scr[:, lo:lo + HW] +
                   wsp_ref[1, t] * mpad_scr[:, lo:lo + HW])        # (Bt, HW)
            acc = acc + win * col_masks[dx + pad]                  # mask row-wrap
    sp_att = _sigmoid(acc)                                         # (Bt, HW)

    # ---- combine: both attentions are applied to the ORIGINAL x -------------
    for b in range(Bt):
        xb = x_ref[b]
        o_ref[b] = (_sigmoid(xb * ch_att[:, b:b + 1]) *
                    _sigmoid(xb * sp_att[b:b + 1, :]))


def _pick_block_batch(B, C, HW):
    """Images per grid step: big enough to amortize the ~0.35us per-step
    overhead, small enough for VMEM (v5e 16 MiB scoped default is the floor),
    and leaving >= 2 grid steps so v7x's two TensorCores both get work."""
    bytes_per_img = C * HW * 4
    budget = 8 * 1024 * 1024                 # x in + out, double-buffered
    bt = min(8, B, max(1, budget // (4 * bytes_per_img)))
    if B >= 2:
        bt = min(bt, B // 2)
    bt = max(bt, 1)
    while B % bt:
        bt -= 1
    return bt


def cbam_pallas(x, params, *, ksize=7):
    B, C, H, W = x.shape
    HW = H * W
    pad = ksize // 2
    P = pad * W + pad
    K = 2 * pad + 1

    # TODO(synk): for very large B*C*HW, stream x/out in bf16 to halve HBM traffic.
    x_flat = x.reshape(B, C, HW).astype(jnp.float32)
    w1, b1col, w2, b2col, wsp, bconv = params
    hid = w1.shape[0]

    # Column-validity masks for each horizontal tap offset dx (precomputed on
    # host): 1.0 where the tap does not cross a row boundary of the image.
    cols = np.tile(np.arange(W), H)
    dxmask = np.stack(
        [((cols + dx >= 0) & (cols + dx < W)).astype(np.float32)
         for dx in range(-pad, pad + 1)])                          # (K, HW)
    dxmask = jnp.asarray(dxmask)

    Bt = _pick_block_batch(B, C, HW)
    grid = (B // Bt,)
    kernel = functools.partial(cbam_kernel, W=W, pad=pad)

    out = pl.pallas_call(
        kernel,
        out_shape=jax.ShapeDtypeStruct((B, C, HW), jnp.float32),
        grid_spec=pltpu.PrefetchScalarGridSpec(
            num_scalar_prefetch=0,
            grid=grid,
            in_specs=[
                pl.BlockSpec((Bt, C, HW), lambda i: (i, 0, 0)),      # x tile
                pl.BlockSpec((K, HW), lambda i: (0, 0)),             # dx masks
                pl.BlockSpec((hid, C), lambda i: (0, 0)),            # W1
                pl.BlockSpec((hid, 1), lambda i: (0, 0)),            # b1
                pl.BlockSpec((C, hid), lambda i: (0, 0)),            # W2
                pl.BlockSpec((C, 1), lambda i: (0, 0)),              # b2
                pl.BlockSpec(memory_space=pltpu.MemorySpace.SMEM),   # conv taps (2, k*k)
                pl.BlockSpec(memory_space=pltpu.MemorySpace.SMEM),   # conv bias (1, 1)
            ],
            out_specs=pl.BlockSpec((Bt, C, HW), lambda i: (i, 0, 0)),
            scratch_shapes=[
                pltpu.VMEM((C, 2 * Bt), jnp.float32),                # pooled cols
                pltpu.VMEM((Bt, HW + 2 * P), jnp.float32),           # padded avg map
                pltpu.VMEM((Bt, HW + 2 * P), jnp.float32),           # padded max map
            ],
        ),
        compiler_params=pltpu.CompilerParams(
            dimension_semantics=("parallel",)),
    )(x_flat, dxmask, w1, b1col, w2, b2col, wsp, bconv)
    return out.reshape(B, C, H, W)


def init_params(key, C, ratio=8, ksize=7):
    """Deterministic PyTorch-style init (uniform +-1/sqrt(fan_in))."""
    hid = C // ratio
    k1, k2, k3, k4, k5, k6 = jax.random.split(key, 6)
    lim1 = 1.0 / np.sqrt(C)
    w1 = jax.random.uniform(k1, (hid, C), jnp.float32, -lim1, lim1)
    b1 = jax.random.uniform(k2, (hid,), jnp.float32, -lim1, lim1)
    lim2 = 1.0 / np.sqrt(hid)
    w2 = jax.random.uniform(k3, (C, hid), jnp.float32, -lim2, lim2)
    b2 = jax.random.uniform(k4, (C,), jnp.float32, -lim2, lim2)
    limc = 1.0 / np.sqrt(2 * ksize * ksize)
    conv_w = jax.random.uniform(k5, (1, 2, ksize, ksize), jnp.float32, -limc, limc)
    conv_b = jax.random.uniform(k6, (1,), jnp.float32, -limc, limc)
    return w1, b1, w2, b2, conv_w, conv_b


def cbam_reference(x, w1, b1, w2, b2, conv_w, conv_b):
    """Pure-JAX reference mirroring the PyTorch module (f32-accurate)."""
    avg = x.mean(axis=(2, 3))
    mx = x.max(axis=(2, 3))

    def mlp(v):
        h = jnp.maximum(jnp.dot(v, w1.T, precision=lax.Precision.HIGHEST) + b1, 0.0)
        return jnp.dot(h, w2.T, precision=lax.Precision.HIGHEST) + b2

    ch = jax.nn.sigmoid(mlp(avg) + mlp(mx))[:, :, None, None]
    x1 = jax.nn.sigmoid(x * ch)

    avg_s = x.mean(axis=1, keepdims=True)
    max_s = x.max(axis=1, keepdims=True)
    sp_in = jnp.concatenate([avg_s, max_s], axis=1)
    sp = lax.conv_general_dilated(
        sp_in, conv_w, window_strides=(1, 1), padding="SAME",
        dimension_numbers=("NCHW", "OIHW", "NCHW"),
        precision=lax.Precision.HIGHEST) + conv_b.reshape(1, 1, 1, 1)
    x2 = jax.nn.sigmoid(x * jax.nn.sigmoid(sp))
    return x1 * x2


if __name__ == "__main__":
    key = jax.random.PRNGKey(0)
    kx, kp = jax.random.split(key)

    B, C, H, W = 2, 16, 16, 16          # num_features=16, ratio=8 -> hidden=2
    ratio, ksize = 8, 7
    x = jax.random.normal(kx, (B, C, H, W), jnp.float32)
    w1, b1, w2, b2, conv_w, conv_b = init_params(kp, C, ratio, ksize)

    params = (
        w1,                                                        # (hid, C)
        b1.reshape(-1, 1),                                         # (hid, 1)
        w2,                                                        # (C, hid)
        b2.reshape(-1, 1),                                         # (C, 1)
        conv_w[0].reshape(2, ksize * ksize).astype(jnp.float32),   # (2, k*k): [avg; max] taps
        conv_b.reshape(1, 1).astype(jnp.float32),                  # (1, 1)
    )

    out = cbam_pallas(x, params, ksize=ksize)
    out = jax.block_until_ready(out)

    ref = cbam_reference(x, w1, b1, w2, b2, conv_w, conv_b)
    diff = float(np.max(np.abs(np.asarray(out) - np.asarray(ref))))
    if not np.allclose(np.asarray(out), np.asarray(ref), atol=1e-4, rtol=1e-4):
        raise AssertionError("Pallas CBAM mismatch vs reference, max abs diff = %g" % diff)
    print("KERNEL_OK")
</pallas_src>

<mosaic_0001>
module attributes {stable_mosaic.version = 11 : i64} {
  func.func @cbam_kernel(%arg0: i32, %arg1: memref<1x16x256xf32, #tpu.memory_space<vmem>>, %arg2: memref<7x256xf32, #tpu.memory_space<vmem>>, %arg3: memref<2x16xf32, #tpu.memory_space<vmem>>, %arg4: memref<2x1xf32, #tpu.memory_space<vmem>>, %arg5: memref<16x2xf32, #tpu.memory_space<vmem>>, %arg6: memref<16x1xf32, #tpu.memory_space<vmem>>, %arg7: memref<2x49xf32, #tpu.memory_space<smem>>, %arg8: memref<1x1xf32, #tpu.memory_space<smem>>, %arg9: memref<1x16x256xf32, #tpu.memory_space<vmem>>, %arg10: memref<16x2xf32, #tpu.memory_space<vmem>>, %arg11: memref<1x358xf32, #tpu.memory_space<vmem>>, %arg12: memref<1x358xf32, #tpu.memory_space<vmem>>) attributes {dimension_semantics = [#tpu.dimension_semantics<parallel>], iteration_bounds = array<i64: 2>, scalar_prefetch = 0 : i64, scratch_operands = 3 : i64, tpu.core_type = #tpu.core_type<tc>, window_params = [{transform_indices = @transform_0, window_bounds = array<i64: 1, 16, 256>}, {pipeline_mode = #tpu.pipeline_mode<synchronous>, transform_indices = @transform_1, window_bounds = array<i64: 7, 256>}, {pipeline_mode = #tpu.pipeline_mode<synchronous>, transform_indices = @transform_2, window_bounds = array<i64: 2, 16>}, {pipeline_mode = #tpu.pipeline_mode<synchronous>, transform_indices = @transform_3, window_bounds = array<i64: 2, 1>}, {pipeline_mode = #tpu.pipeline_mode<synchronous>, transform_indices = @transform_4, window_bounds = array<i64: 16, 2>}, {pipeline_mode = #tpu.pipeline_mode<synchronous>, transform_indices = @transform_5, window_bounds = array<i64: 16, 1>}, {transform_indices = @transform_6, window_bounds = array<i64: 2, 49>}, {transform_indices = @transform_7, window_bounds = array<i64: 1, 1>}, {transform_indices = @transform_8, window_bounds = array<i64: 1, 16, 256>}]} {
    %cst = arith.constant 0.000000e+00 : f32
    %0 = vector.broadcast %cst : f32 to vector<1x51xf32>
    %c0 = arith.constant 0 : index
    %c0_0 = arith.constant 0 : index
    %1 = vector.load %arg11[%c0, %c0_0] : memref<1x358xf32, #tpu.memory_space<vmem>>, vector<1x51xf32>
    tpu.vector_store %arg11[%c0, %c0_0], %0 {strides = array<i32>} : memref<1x358xf32, #tpu.memory_space<vmem>>, vector<1x51xf32>,
    %c0_1 = arith.constant 0 : index
    %c307 = arith.constant 307 : index
    %2 = vector.load %arg11[%c0_1, %c307] : memref<1x358xf32, #tpu.memory_space<vmem>>, vector<1x51xf32>
    tpu.vector_store %arg11[%c0_1, %c307], %0 {strides = array<i32>} : memref<1x358xf32, #tpu.memory_space<vmem>>, vector<1x51xf32>,
    %c0_2 = arith.constant 0 : index
    %c0_3 = arith.constant 0 : index
    %3 = vector.load %arg12[%c0_2, %c0_3] : memref<1x358xf32, #tpu.memory_space<vmem>>, vector<1x51xf32>
    tpu.vector_store %arg12[%c0_2, %c0_3], %0 {strides = array<i32>} : memref<1x358xf32, #tpu.memory_space<vmem>>, vector<1x51xf32>,
    %c0_4 = arith.constant 0 : index
    %c307_5 = arith.constant 307 : index
    %4 = vector.load %arg12[%c0_4, %c307_5] : memref<1x358xf32, #tpu.memory_space<vmem>>, vector<1x51xf32>
    tpu.vector_store %arg12[%c0_4, %c307_5], %0 {strides = array<i32>} : memref<1x358xf32, #tpu.memory_space<vmem>>, vector<1x51xf32>,
    %c0_6 = arith.constant 0 : index
    %c0_7 = arith.constant 0 : index
    %c0_8 = arith.constant 0 : index
    %5 = vector.load %arg1[%c0_6, %c0_7, %c0_8] : memref<1x16x256xf32, #tpu.memory_space<vmem>>, vector<1x16x256xf32>
    %6 = vector.shape_cast %5 : vector<1x16x256xf32> to vector<16x256xf32>
    %cst_9 = arith.constant dense<0.000000e+00> : vector<16xf32>
    %7 = vector.multi_reduction <add>, %6, %cst_9 [1] : vector<16x256xf32> to vector<16xf32>
    %8 = vector.shape_cast %7 : vector<16xf32> to vector<16x1xf32>
    %cst_10 = arith.constant 2.560000e+02 : f32
    %9 = vector.broadcast %cst_10 : f32 to vector<16x1xf32>
    %10 = arith.divf %8, %9 : vector<16x1xf32>
    %c0_11 = arith.constant 0 : index
    %c0_12 = arith.constant 0 : index
    %11 = vector.load %arg10[%c0_11, %c0_12] : memref<16x2xf32, #tpu.memory_space<vmem>>, vector<16x1xf32>
    tpu.vector_store %arg10[%c0_11, %c0_12], %10 {strides = array<i32>} : memref<16x2xf32, #tpu.memory_space<vmem>>, vector<16x1xf32>,
    %cst_13 = arith.constant dense<0xFF800000> : vector<16xf32>
    %12 = vector.multi_reduction <maximumf>, %6, %cst_13 [1] : vector<16x256xf32> to vector<16xf32>
    %13 = vector.shape_cast %12 : vector<16xf32> to vector<16x1xf32>
    %c0_14 = arith.constant 0 : index
    %c1 = arith.constant 1 : index
    %14 = vector.load %arg10[%c0_14, %c1] : memref<16x2xf32, #tpu.memory_space<vmem>>, vector<16x1xf32>
    tpu.vector_store %arg10[%c0_14, %c1], %13 {strides = array<i32>} : memref<16x2xf32, #tpu.memory_space<vmem>>, vector<16x1xf32>,
    %cst_15 = arith.constant dense<0.000000e+00> : vector<256xf32>
    %15 = vector.multi_reduction <add>, %6, %cst_15 [0] : vector<16x256xf32> to vector<256xf32>
    %16 = vector.shape_cast %15 : vector<256xf32> to vector<1x256xf32>
    %cst_16 = arith.constant 1.600000e+01 : f32
    %17 = vector.broadcast %cst_16 : f32 to vector<1x256xf32>
    %18 = arith.divf %16, %17 : vector<1x256xf32>
    %c0_17 = arith.constant 0 : index
    %c51 = arith.constant 51 : index
    %19 = vector.load %arg11[%c0_17, %c51] : memref<1x358xf32, #tpu.memory_space<vmem>>, vector<1x256xf32>
    tpu.vector_store %arg11[%c0_17, %c51], %18 {strides = array<i32>} : memref<1x358xf32, #tpu.memory_space<vmem>>, vector<1x256xf32>,
    %cst_18 = arith.constant dense<0xFF800000> : vector<256xf32>
    %20 = vector.multi_reduction <maximumf>, %6, %cst_18 [0] : vector<16x256xf32> to vector<256xf32>
    %21 = vector.shape_cast %20 : vector<256xf32> to vector<1x256xf32>
    %c0_19 = arith.constant 0 : index
    %c51_20 = arith.constant 51 : index
    %22 = vector.load %arg12[%c0_19, %c51_20] : memref<1x358xf32, #tpu.memory_space<vmem>>, vector<1x256xf32>
    tpu.vector_store %arg12[%c0_19, %c51_20], %21 {strides = array<i32>} : memref<1x358xf32, #tpu.memory_space<vmem>>, vector<1x256xf32>,
    %c0_21 = arith.constant 0 : index
    %c0_22 = arith.constant 0 : index
    %23 = vector.load %arg10[%c0_21, %c0_22] : memref<16x2xf32, #tpu.memory_space<vmem>>, vector<16x2xf32>
    %c0_23 = arith.constant 0 : index
    %c0_24 = arith.constant 0 : index
    %24 = vector.load %arg3[%c0_23, %c0_24] : memref<2x16xf32, #tpu.memory_space<vmem>>, vector<2x16xf32>
    %cst_25 = arith.constant dense<0.000000e+00> : vector<2x2xf32>
    %25 = tpu.matmul %24, %23, %cst_25 {dimension_numbers = #tpu.dot_dimension_numbers<[1], [0], [0], [1], [0, 0, 1, 1], [], []>} : vector<2x16xf32>, vector<16x2xf32>, vector<2x2xf32> -> vector<2x2xf32>
    %c0_26 = arith.constant 0 : index
    %c0_27 = arith.constant 0 : index
    %26 = vector.load %arg4[%c0_26, %c0_27] : memref<2x1xf32, #tpu.memory_space<vmem>>, vector<2x1xf32>
    %27 = vector.broadcast %26 : vector<2x1xf32> to vector<2x2xf32>
    %28 = arith.addf %25, %27 : vector<2x2xf32>
    %cst_28 = arith.constant 0.000000e+00 : f32
    %29 = vector.broadcast %cst_28 : f32 to vector<2x2xf32>
    %30 = arith.maximumf %28, %29 : vector<2x2xf32>
    %c0_29 = arith.constant 0 : index
    %c0_30 = arith.constant 0 : index
    %31 = vector.load %arg5[%c0_29, %c0_30] : memref<16x2xf32, #tpu.memory_space<vmem>>, vector<16x2xf32>
    %cst_31 = arith.constant dense<0.000000e+00> : vector<16x2xf32>
    %32 = tpu.matmul %31, %30, %cst_31 {dimension_numbers = #tpu.dot_dimension_numbers<[1], [0], [0], [1], [0, 0, 1, 1], [], []>} : vector<16x2xf32>, vector<2x2xf32>, vector<16x2xf32> -> vector<16x2xf32>
    %c0_32 = arith.constant 0 : index
    %c0_33 = arith.constant 0 : index
    %33 = vector.load %arg6[%c0_32, %c0_33] : memref<16x1xf32, #tpu.memory_space<vmem>>, vector<16x1xf32>
    %34 = vector.broadcast %33 : vector<16x1xf32> to vector<16x2xf32>
    %35 = arith.addf %32, %34 : vector<16x2xf32>
    %36 = vector.extract_strided_slice %35 {offsets = [0, 0], sizes = [16, 1], strides = [1, 1]} : vector<16x2xf32> to vector<16x1xf32>
    %37 = vector.extract_strided_slice %35 {offsets = [0, 1], sizes = [16, 1], strides = [1, 1]} : vector<16x2xf32> to vector<16x1xf32>
    %38 = arith.addf %36, %37 : vector<16x1xf32>
    %cst_34 = arith.constant 5.000000e-01 : f32
    %39 = vector.broadcast %cst_34 : f32 to vector<16x1xf32>
    %40 = arith.mulf %39, %38 : vector<16x1xf32>
    %41 = math.tanh %40 : vector<16x1xf32>
    %cst_35 = arith.constant 1.000000e+00 : f32
    %42 = vector.broadcast %cst_35 : f32 to vector<16x1xf32>
    %43 = arith.addf %41, %42 : vector<16x1xf32>
    %cst_36 = arith.constant 5.000000e-01 : f32
    %44 = vector.broadcast %cst_36 : f32 to vector<16x1xf32>
    %45 = arith.mulf %44, %43 : vector<16x1xf32>
    %c0_37 = arith.constant 0 : index
    %c0_38 = arith.constant 0 : index
    %46 = vector.load %arg2[%c0_37, %c0_38] : memref<7x256xf32, #tpu.memory_space<vmem>>, vector<1x256xf32>
    %c1_39 = arith.constant 1 : index
    %c0_40 = arith.constant 0 : index
    %47 = vector.load %arg2[%c1_39, %c0_40] : memref<7x256xf32, #tpu.memory_space<vmem>>, vector<1x256xf32>
    %c2 = arith.constant 2 : index
    %c0_41 = arith.constant 0 : index
    %48 = vector.load %arg2[%c2, %c0_41] : memref<7x256xf32, #tpu.memory_space<vmem>>, vector<1x256xf32>
    %c3 = arith.constant 3 : index
    %c0_42 = arith.constant 0 : index
    %49 = vector.load %arg2[%c3, %c0_42] : memref<7x256xf32, #tpu.memory_space<vmem>>, vector<1x256xf32>
    %c4 = arith.constant 4 : index
    %c0_43 = arith.constant 0 : index
    %50 = vector.load %arg2[%c4, %c0_43] : memref<7x256xf32, #tpu.memory_space<vmem>>, vector<1x256xf32>
    %c5 = arith.constant 5 : index
    %c0_44 = arith.constant 0 : index
    %51 = vector.load %arg2[%c5, %c0_44] : memref<7x256xf32, #tpu.memory_space<vmem>>, vector<1x256xf32>
    %c6 = arith.constant 6 : index
    %c0_45 = arith.constant 0 : index
    %52 = vector.load %arg2[%c6, %c0_45] : memref<7x256xf32, #tpu.memory_space<vmem>>, vector<1x256xf32>
    %cst_46 = arith.constant 0.000000e+00 : f32
    %53 = vector.broadcast %cst_46 : f32 to vector<1x256xf32>
    %c0_47 = arith.constant 0 : index
    %c0_48 = arith.constant 0 : index
    %54 = memref.load %arg8[%c0_47, %c0_48] : memref<1x1xf32, #tpu.memory_space<smem>>
    %55 = vector.broadcast %54 : f32 to vector<1x256xf32>
    %56 = arith.addf %53, %55 : vector<1x256xf32>
    %c0_49 = arith.constant 0 : index
    %c0_50 = arith.constant 0 : index
    %57 = memref.load %arg7[%c0_49, %c0_50] : memref<2x49xf32, #tpu.memory_space<smem>>
    %c0_51 = arith.constant 0 : index
    %c0_52 = arith.constant 0 : index
    %58 = vector.load %arg11[%c0_51, %c0_52] : memref<1x358xf32, #tpu.memory_space<vmem>>, vector<1x256xf32>
    %59 = vector.broadcast %57 : f32 to vector<1x256xf32>
    %60 = arith.mulf %59, %58 : vector<1x256xf32>
    %c1_53 = arith.constant 1 : index
    %c0_54 = arith.constant 0 : index
    %61 = memref.load %arg7[%c1_53, %c0_54] : memref<2x49xf32, #tpu.memory_space<smem>>
    %c0_55 = arith.constant 0 : index
    %c0_56 = arith.constant 0 : index
    %62 = vector.load %arg12[%c0_55, %c0_56] : memref<1x358xf32, #tpu.memory_space<vmem>>, vector<1x256xf32>
    %63 = vector.broadcast %61 : f32 to vector<1x256xf32>
    %64 = arith.mulf %63, %62 : vector<1x256xf32>
    %65 = arith.addf %60, %64 : vector<1x256xf32>
    %66 = arith.mulf %65, %46 : vector<1x256xf32>
    %67 = arith.addf %56, %66 : vector<1x256xf32>
    %c0_57 = arith.constant 0 : index
    %c1_58 = arith.constant 1 : index
    %68 = memref.load %arg7[%c0_57, %c1_58] : memref<2x49xf32, #tpu.memory_space<smem>>
    %c0_59 = arith.constant 0 : index
    %c1_60 = arith.constant 1 : index
    %69 = vector.load %arg11[%c0_59, %c1_60] : memref<1x358xf32, #tpu.memory_space<vmem>>, vector<1x256xf32>
    %70 = vector.broadcast %68 : f32 to vector<1x256xf32>
    %71 = arith.mulf %70, %69 : vector<1x256xf32>
    %c1_61 = arith.constant 1 : index
    %c1_62 = arith.constant 1 : index
    %72 = memref.load %arg7[%c1_61, %c1_62] : memref<2x49xf32, #tpu.memory_space<smem>>
    %c0_63 = arith.constant 0 : index
    %c1_64 = arith.constant 1 : index
    %73 = vector.load %arg12[%c0_63, %c1_64] : memref<1x358xf32, #tpu.memory_space<vmem>>, vector<1x256xf32>
    %74 = vector.broadcast %72 : f32 to vector<1x256xf32>
    %75 = arith.mulf %74, %73 : vector<1x256xf32>
    %76 = arith.addf %71, %75 : vector<1x256xf32>
    %77 = arith.mulf %76, %47 : vector<1x256xf32>
    %78 = arith.addf %67, %77 : vector<1x256xf32>
    %c0_65 = arith.constant 0 : index
    %c2_66 = arith.constant 2 : index
    %79 = memref.load %arg7[%c0_65, %c2_66] : memref<2x49xf32, #tpu.memory_space<smem>>
    %c0_67 = arith.constant 0 : index
    %c2_68 = arith.constant 2 : index
    %80 = vector.load %arg11[%c0_67, %c2_68] : memref<1x358xf32, #tpu.memory_space<vmem>>, vector<1x256xf32>
    %81 = vector.broadcast %79 : f32 to vector<1x256xf32>
    %82 = arith.mulf %81, %80 : vector<1x256xf32>
    %c1_69 = arith.constant 1 : index
    %c2_70 = arith.constant 2 : index
    %83 = memref.load %arg7[%c1_69, %c2_70] : memref<2x49xf32, #tpu.memory_space<smem>>
    %c0_71 = arith.constant 0 : index
    %c2_72 = arith.constant 2 : index
    %84 = vector.load %arg12[%c0_71, %c2_72] : memref<1x358xf32, #tpu.memory_space<vmem>>, vector<1x256xf32>
    %85 = vector.broadcast %83 : f32 to vector<1x256xf32>
    %86 = arith.mulf %85, %84 : vector<1x256xf32>
    %87 = arith.addf %82, %86 : vector<1x256xf32>
    %88 = arith.mulf %87, %48 : vector<1x256xf32>
    %89 = arith.addf %78, %88 : vector<1x256xf32>
    %c0_73 = arith.constant 0 : index
    %c3_74 = arith.constant 3 : index
    %90 = memref.load %arg7[%c0_73, %c3_74] : memref<2x49xf32, #tpu.memory_space<smem>>
    %c0_75 = arith.constant 0 : index
    %c3_76 = arith.constant 3 : index
    %91 = vector.load %arg11[%c0_75, %c3_76] : memref<1x358xf32, #tpu.memory_space<vmem>>, vector<1x256xf32>
    %92 = vector.broadcast %90 : f32 to vector<1x256xf32>
    %93 = arith.mulf %92, %91 : vector<1x256xf32>
    %c1_77 = arith.constant 1 : index
    %c3_78 = arith.constant 3 : index
    %94 = memref.load %arg7[%c1_77, %c3_78] : memref<2x49xf32, #tpu.memory_space<smem>>
    %c0_79 = arith.constant 0 : index
    %c3_80 = arith.constant 3 : index
    %95 = vector.load %arg12[%c0_79, %c3_80] : memref<1x358xf32, #tpu.memory_space<vmem>>, vector<1x256xf32>
    %96 = vector.broadcast %94 : f32 to vector<1x256xf32>
    %97 = arith.mulf %96, %95 : vector<1x256xf32>
    %98 = arith.addf %93, %97 : vector<1x256xf32>
    %99 = arith.mulf %98, %49 : vector<1x256xf32>
    %100 = arith.addf %89, %99 : vector<1x256xf32>
    %c0_81 = arith.constant 0 : index
    %c4_82 = arith.constant 4 : index
    %101 = memref.load %arg7[%c0_81, %c4_82] : memref<2x49xf32, #tpu.memory_space<smem>>
    %c0_83 = arith.constant 0 : index
    %c4_84 = arith.constant 4 : index
    %102 = vector.load %arg11[%c0_83, %c4_84] : memref<1x358xf32, #tpu.memory_space<vmem>>, vector<1x256xf32>
    %103 = vector.broadcast %101 : f32 to vector<1x256xf32>
    %104 = arith.mulf %103, %102 : vector<1x256xf32>
    %c1_85 = arith.constant 1 : index
    %c4_86 = arith.constant 4 : index
    %105 = memref.load %arg7[%c1_85, %c4_86] : memref<2x49xf32, #tpu.memory_space<smem>>
    %c0_87 = arith.constant 0 : index
    %c4_88 = arith.constant 4 : index
    %106 = vector.load %arg12[%c0_87, %c4_88] : memref<1x358xf32, #tpu.memory_space<vmem>>, vector<1x256xf32>
    %107 = vector.broadcast %105 : f32 to vector<1x256xf32>
    %108 = arith.mulf %107, %106 : vector<1x256xf32>
    %109 = arith.addf %104, %108 : vector<1x256xf32>
    %110 = arith.mulf %109, %50 : vector<1x256xf32>
    %111 = arith.addf %100, %110 : vector<1x256xf32>
    %c0_89 = arith.constant 0 : index
    %c5_90 = arith.constant 5 : index
    %112 = memref.load %arg7[%c0_89, %c5_90] : memref<2x49xf32, #tpu.memory_space<smem>>
    %c0_91 = arith.constant 0 : index
    %c5_92 = arith.constant 5 : index
    %113 = vector.load %arg11[%c0_91, %c5_92] : memref<1x358xf32, #tpu.memory_space<vmem>>, vector<1x256xf32>
    %114 = vector.broadcast %112 : f32 to vector<1x256xf32>
    %115 = arith.mulf %114, %113 : vector<1x256xf32>
    %c1_93 = arith.constant 1 : index
    %c5_94 = arith.constant 5 : index
    %116 = memref.load %arg7[%c1_93, %c5_94] : memref<2x49xf32, #tpu.memory_space<smem>>
    %c0_95 = arith.constant 0 : index
    %c5_96 = arith.constant 5 : index
    %117 = vector.load %arg12[%c0_95, %c5_96] : memref<1x358xf32, #tpu.memory_space<vmem>>, vector<1x256xf32>
    %118 = vector.broadcast %116 : f32 to vector<1x256xf32>
    %119 = arith.mulf %118, %117 : vector<1x256xf32>
    %120 = arith.addf %115, %119 : vector<1x256xf32>
    %121 = arith.mulf %120, %51 : vector<1x256xf32>
    %122 = arith.addf %111, %121 : vector<1x256xf32>
    %c0_97 = arith.constant 0 : index
    %c6_98 = arith.constant 6 : index
    %123 = memref.load %arg7[%c0_97, %c6_98] : memref<2x49xf32, #tpu.memory_space<smem>>
    %c0_99 = arith.constant 0 : index
    %c6_100 = arith.constant 6 : index
    %124 = vector.load %arg11[%c0_99, %c6_100] : memref<1x358xf32, #tpu.memory_space<vmem>>, vector<1x256xf32>
    %125 = vector.broadcast %123 : f32 to vector<1x256xf32>
    %126 = arith.mulf %125, %124 : vector<1x256xf32>
    %c1_101 = arith.constant 1 : index
    %c6_102 = arith.constant 6 : index
    %127 = memref.load %arg7[%c1_101, %c6_102] : memref<2x49xf32, #tpu.memory_space<smem>>
    %c0_103 = arith.constant 0 : index
    %c6_104 = arith.constant 6 : index
    %128 = vector.load %arg12[%c0_103, %c6_104] : memref<1x358xf32, #tpu.memory_space<vmem>>, vector<1x256xf32>
    %129 = vector.broadcast %127 : f32 to vector<1x256xf32>
    %130 = arith.mulf %129, %128 : vector<1x256xf32>
    %131 = arith.addf %126, %130 : vector<1x256xf32>
    %132 = arith.mulf %131, %52 : vector<1x256xf32>
    %133 = arith.addf %122, %132 : vector<1x256xf32>
    %c0_105 = arith.constant 0 : index
    %c7 = arith.constant 7 : index
    %134 = memref.load %arg7[%c0_105, %c7] : memref<2x49xf32, #tpu.memory_space<smem>>
    %c0_106 = arith.constant 0 : index
    %c16 = arith.constant 16 : index
    %135 = vector.load %arg11[%c0_106, %c16] : memref<1x358xf32, #tpu.memory_space<vmem>>, vector<1x256xf32>
    %136 = vector.broadcast %134 : f32 to vector<1x256xf32>
    %137 = arith.mulf %136, %135 : vector<1x256xf32>
    %c1_107 = arith.constant 1 : index
    %c7_108 = arith.constant 7 : index
    %138 = memref.load %arg7[%c1_107, %c7_108] : memref<2x49xf32, #tpu.memory_space<smem>>
    %c0_109 = arith.constant 0 : index
    %c16_110 = arith.constant 16 : index
    %139 = vector.load %arg12[%c0_109, %c16_110] : memref<1x358xf32, #tpu.memory_space<vmem>>, vector<1x256xf32>
    %140 = vector.broadcast %138 : f32 to vector<1x256xf32>
    %141 = arith.mulf %140, %139 : vector<1x256xf32>
    %142 = arith.addf %137, %141 : vector<1x256xf32>
    %143 = arith.mulf %142, %46 : vector<1x256xf32>
    %144 = arith.addf %133, %143 : vector<1x256xf32>
    %c0_111 = arith.constant 0 : index
    %c8 = arith.constant 8 : index
    %145 = memref.load %arg7[%c0_111, %c8] : memref<2x49xf32, #tpu.memory_space<smem>>
    %c0_112 = arith.constant 0 : index
    %c17 = arith.constant 17 : index
    %146 = vector.load %arg11[%c0_112, %c17] : memref<1x358xf32, #tpu.memory_space<vmem>>, vector<1x256xf32>
    %147 = vector.broadcast %145 : f32 to vector<1x256xf32>
    %148 = arith.mulf %147, %146 : vector<1x256xf32>
    %c1_113 = arith.constant 1 : index
    %c8_114 = arith.constant 8 : index
    %149 = memref.load %arg7[%c1_113, %c8_114] : memref<2x49xf32, #tpu.memory_space<smem>>
    %c0_115 = arith.constant 0 : index
    %c17_116 = arith.constant 17 : index
    %150 = vector.load %arg12[%c0_115, %c17_116] : memref<1x358xf32, #tpu.memory_space<vmem>>, vector<1x256xf32>
    %151 = vector.broadcast %149 : f32 to vector<1x256xf32>
    %152 = arith.mulf %151, %150 : vector<1x256xf32>
    %153 = arith.addf %148, %152 : vector<1x256xf32>
    %154 = arith.mulf %153, %47 : vector<1x256xf32>
    %155 = arith.addf %144, %154 : vector<1x256xf32>
    %c0_117 = arith.constant 0 : index
    %c9 = arith.constant 9 : index
    %156 = memref.load %arg7[%c0_117, %c9] : memref<2x49xf32, #tpu.memory_space<smem>>
    %c0_118 = arith.constant 0 : index
    %c18 = arith.constant 18 : index
    %157 = vector.load %arg11[%c0_118, %c18] : memref<1x358xf32, #tpu.memory_space<vmem>>, vector<1x256xf32>
    %158 = vector.broadcast %156 : f32 to vector<1x256xf32>
    %159 = arith.mulf %158, %157 : vector<1x256xf32>
    %c1_119 = arith.constant 1 : index
    %c9_120 = arith.constant 9 : index
    %160 = memref.load %arg7[%c1_119, %c9_120] : memref<2x49xf32, #tpu.memory_space<smem>>
    %c0_121 = arith.constant 0 : index
    %c18_122 = arith.constant 18 : index
    %161 = vector.load %arg12[%c0_121, %c18_122] : memref<1x358xf32, #tpu.memory_space<vmem>>, vector<1x256xf32>
    %162 = vector.broadcast %160 : f32 to vector<1x256xf32>
    %163 = arith.mulf %162, %161 : vector<1x256xf32>
    %164 = arith.addf %159, %163 : vector<1x256xf32>
    %165 = arith.mulf %164, %48 : vector<1x256xf32>
    %166 = arith.addf %155, %165 : vector<1x256xf32>
    %c0_123 = arith.constant 0 : index
    %c10 = arith.constant 10 : index
    %167 = memref.load %arg7[%c0_123, %c10] : memref<2x49xf32, #tpu.memory_space<smem>>
    %c0_124 = arith.constant 0 : index
    %c19 = arith.constant 19 : index
    %168 = vector.load %arg11[%c0_124, %c19] : memref<1x358xf32, #tpu.memory_space<vmem>>, vector<1x256xf32>
    %169 = vector.broadcast %167 : f32 to vector<1x256xf32>
    %170 = arith.mulf %169, %168 : vector<1x256xf32>
    %c1_125 = arith.constant 1 : index
    %c10_126 = arith.constant 10 : index
    %171 = memref.load %arg7[%c1_125, %c10_126] : memref<2x49xf32, #tpu.memory_space<smem>>
    %c0_127 = arith.constant 0 : index
    %c19_128 = arith.constant 19 : index
    %172 = vector.load %arg12[%c0_127, %c19_128] : memref<1x358xf32, #tpu.memory_space<vmem>>, vector<1x256xf32>
    %173 = vector.broadcast %171 : f32 to vector<1x256xf32>
    %174 = arith.mulf %173, %172 : vector<1x256xf32>
    %175 = arith.addf %170, %174 : vector<1x256xf32>
    %176 = arith.mulf %175, %49 : vector<1x256xf32>
    %177 = arith.addf %166, %176 : vector<1x256xf32>
    %c0_129 = arith.constant 0 : index
    %c11 = arith.constant 11 : index
    %178 = memref.load %arg7[%c0_129, %c11] : memref<2x49xf32, #tpu.memory_space<smem>>
    %c0_130 = arith.constant 0 : index
    %c20 = arith.constant 20 : index
    %179 = vector.load %arg11[%c0_130, %c20] : memref<1x358xf32, #tpu.memory_space<vmem>>, vector<1x256xf32>
    %180 = vector.broadcast %178 : f32 to vector<1x256xf32>
    %181 = arith.mulf %180, %179 : vector<1x256xf32>
    %c1_131 = arith.constant 1 : index
    %c11_132 = arith.constant 11 : index
    %182 = memref.load %arg7[%c1_131, %c11_132] : memref<2x49xf32, #tpu.memory_space<smem>>
    %c0_133 = arith.constant 0 : index
    %c20_134 = arith.constant 20 : index
    %183 = vector.load %arg12[%c0_133, %c20_134] : memref<1x358xf32, #tpu.memory_space<vmem>>, vector<1x256xf32>
    %184 = vector.broadcast %182 : f32 to vector<1x256xf32>
    %185 = arith.mulf %184, %183 : vector<1x256xf32>
    %186 = arith.addf %181, %185 : vector<1x256xf32>
    %187 = arith.mulf %186, %50 : vector<1x256xf32>
    %188 = arith.addf %177, %187 : vector<1x256xf32>
    %c0_135 = arith.constant 0 : index
    %c12 = arith.constant 12 : index
    %189 = memref.load %arg7[%c0_135, %c12] : memref<2x49xf32, #tpu.memory_space<smem>>
    %c0_136 = arith.constant 0 : index
    %c21 = arith.constant 21 : index
    %190 = vector.load %arg11[%c0_136, %c21] : memref<1x358xf32, #tpu.memory_space<vmem>>, vector<1x256xf32>
    %191 = vector.broadcast %189 : f32 to vector<1x256xf32>
    %192 = arith.mulf %191, %190 : vector<1x256xf32>
    %c1_137 = arith.constant 1 : index
    %c12_138 = arith.constant 12 : index
    %193 = memref.load %arg7[%c1_137, %c12_138] : memref<2x49xf32, #tpu.memory_space<smem>>
    %c0_139 = arith.constant 0 : index
    %c21_140 = arith.constant 21 : index
    %194 = vector.load %arg12[%c0_139, %c21_140] : memref<1x358xf32, #tpu.memory_space<vmem>>, vector<1x256xf32>
    %195 = vector.broadcast %193 : f32 to vector<1x256xf32>
    %196 = arith.mulf %195, %194 : vector<1x256xf32>
    %197 = arith.addf %192, %196 : vector<1x256xf32>
    %198 = arith.mulf %197, %51 : vector<1x256xf32>
    %199 = arith.addf %188, %198 : vector<1x256xf32>
    %c0_141 = arith.constant 0 : index
    %c13 = arith.constant 13 : index
    %200 = memref.load %arg7[%c0_141, %c13] : memref<2x49xf32, #tpu.memory_space<smem>>
    %c0_142 = arith.constant 0 : index
    %c22 = arith.constant 22 : index
    %201 = vector.load %arg11[%c0_142, %c22] : memref<1x358xf32, #tpu.memory_space<vmem>>, vector<1x256xf32>
    %202 = vector.broadcast %200 : f32 to vector<1x256xf32>
    %203 = arith.mulf %202, %201 : vector<1x256xf32>
    %c1_143 = arith.constant 1 : index
    %c13_144 = arith.constant 13 : index
    %204 = memref.load %arg7[%c1_143, %c13_144] : memref<2x49xf32, #tpu.memory_space<smem>>
    %c0_145 = arith.constant 0 : index
    %c22_146 = arith.constant 22 : index
    %205 = vector.load %arg12[%c0_145, %c22_146] : memref<1x358xf32, #tpu.memory_space<vmem>>, vector<1x256xf32>
    %206 = vector.broadcast %204 : f32 to vector<1x256xf32>
    %207 = arith.mulf %206, %205 : vector<1x256xf32>
    %208 = arith.addf %203, %207 : vector<1x256xf32>
    %209 = arith.mulf %208, %52 : vector<1x256xf32>
    %210 = arith.addf %199, %209 : vector<1x256xf32>
    %c0_147 = arith.constant 0 : index
    %c14 = arith.constant 14 : index
    %211 = memref.load %arg7[%c0_147, %c14] : memref<2x49xf32, #tpu.memory_space<smem>>
    %c0_148 = arith.constant 0 : index
    %c32 = arith.constant 32 : index
    %212 = vector.load %arg11[%c0_148, %c32] : memref<1x358xf32, #tpu.memory_space<vmem>>, vector<1x256xf32>
    %213 = vector.broadcast %211 : f32 to vector<1x256xf32>
    %214 = arith.mulf %213, %212 : vector<1x256xf32>
    %c1_149 = arith.constant 1 : index
    %c14_150 = arith.constant 14 : index
    %215 = memref.load %arg7[%c1_149, %c14_150] : memref<2x49xf32, #tpu.memory_space<smem>>
    %c0_151 = arith.constant 0 : index
    %c32_152 = arith.constant 32 : index
    %216 = vector.load %arg12[%c0_151, %c32_152] : memref<1x358xf32, #tpu.memory_space<vmem>>, vector<1x256xf32>
    %217 = vector.broadcast %215 : f32 to vector<1x256xf32>
    %218 = arith.mulf %217, %216 : vector<1x256xf32>
    %219 = arith.addf %214, %218 : vector<1x256xf32>
    %220 = arith.mulf %219, %46 : vector<1x256xf32>
    %221 = arith.addf %210, %220 : vector<1x256xf32>
    %c0_153 = arith.constant 0 : index
    %c15 = arith.constant 15 : index
    %222 = memref.load %arg7[%c0_153, %c15] : memref<2x49xf32, #tpu.memory_space<smem>>
    %c0_154 = arith.constant 0 : index
    %c33 = arith.constant 33 : index
    %223 = vector.load %arg11[%c0_154, %c33] : memref<1x358xf32, #tpu.memory_space<vmem>>, vector<1x256xf32>
    %224 = vector.broadcast %222 : f32 to vector<1x256xf32>
    %225 = arith.mulf %224, %223 : vector<1x256xf32>
    %c1_155 = arith.constant 1 : index
    %c15_156 = arith.constant 15 : index
    %226 = memref.load %arg7[%c1_155, %c15_156] : memref<2x49xf32, #tpu.memory_space<smem>>
    %c0_157 = arith.constant 0 : index
    %c33_158 = arith.constant 33 : index
    %227 = vector.load %arg12[%c0_157, %c33_158] : memref<1x358xf32, #tpu.memory_space<vmem>>, vector<1x256xf32>
    %228 = vector.broadcast %226 : f32 to vector<1x256xf32>
    %229 = arith.mulf %228, %227 : vector<1x256xf32>
    %230 = arith.addf %225, %229 : vector<1x256xf32>
    %231 = arith.mulf %230, %47 : vector<1x256xf32>
    %232 = arith.addf %221, %231 : vector<1x256xf32>
    %c0_159 = arith.constant 0 : index
    %c16_160 = arith.constant 16 : index
    %233 = memref.load %arg7[%c0_159, %c16_160] : memref<2x49xf32, #tpu.memory_space<smem>>
    %c0_161 = arith.constant 0 : index
    %c34 = arith.constant 34 : index
    %234 = vector.load %arg11[%c0_161, %c34] : memref<1x358xf32, #tpu.memory_space<vmem>>, vector<1x256xf32>
    %235 = vector.broadcast %233 : f32 to vector<1x256xf32>
    %236 = arith.mulf %235, %234 : vector<1x256xf32>
    %c1_162 = arith.constant 1 : index
    %c16_163 = arith.constant 16 : index
    %237 = memref.load %arg7[%c1_162, %c16_163] : memref<2x49xf32, #tpu.memory_space<smem>>
    %c0_164 = arith.constant 0 : index
    %c34_165 = arith.constant 34 : index
    %238 = vector.load %arg12[%c0_164, %c34_165] : memref<1x358xf32, #tpu.memory_space<vmem>>, vector<1x256xf32>
    %239 = vector.broadcast %237 : f32 to vector<1x256xf32>
    %240 = arith.mulf %239, %238 : vector<1x256xf32>
    %241 = arith.addf %236, %240 : vector<1x256xf32>
    %242 = arith.mulf %241, %48 : vector<1x256xf32>
    %243 = arith.addf %232, %242 : vector<1x256xf32>
    %c0_166 = arith.constant 0 : index
    %c17_167 = arith.constant 17 : index
    %244 = memref.load %arg7[%c0_166, %c17_167] : memref<2x49xf32, #tpu.memory_space<smem>>
    %c0_168 = arith.constant 0 : index
    %c35 = arith.constant 35 : index
    %245 = vector.load %arg11[%c0_168, %c35] : memref<1x358xf32, #tpu.memory_space<vmem>>, vector<1x256xf32>
    %246 = vector.broadcast %244 : f32 to vector<1x256xf32>
    %247 = arith.mulf %246, %245 : vector<1x256xf32>
    %c1_169 = arith.constant 1 : index
    %c17_170 = arith.constant 17 : index
    %248 = memref.load %arg7[%c1_169, %c17_170] : memref<2x49xf32, #tpu.memory_space<smem>>
    %c0_171 = arith.constant 0 : index
    %c35_172 = arith.constant 35 : index
    %249 = vector.load %arg12[%c0_171, %c35_172] : memref<1x358xf32, #tpu.memory_space<vmem>>, vector<1x256xf32>
    %250 = vector.broadcast %248 : f32 to vector<1x256xf32>
    %251 = arith.mulf %250, %249 : vector<1x256xf32>
    %252 = arith.addf %247, %251 : vector<1x256xf32>
    %253 = arith.mulf %252, %49 : vector<1x256xf32>
    %254 = arith.addf %243, %253 : vector<1x256xf32>
    %c0_173 = arith.constant 0 : index
    %c18_174 = arith.constant 18 : index
    %255 = memref.load %arg7[%c0_173, %c18_174] : memref<2x49xf32, #tpu.memory_space<smem>>
    %c0_175 = arith.constant 0 : index
    %c36 = arith.constant 36 : index
    %256 = vector.load %arg11[%c0_175, %c36] : memref<1x358xf32, #tpu.memory_space<vmem>>, vector<1x256xf32>
    %257 = vector.broadcast %255 : f32 to vector<1x256xf32>
    %258 = arith.mulf %257, %256 : vector<1x256xf32>
    %c1_176 = arith.constant 1 : index
    %c18_177 = arith.constant 18 : index
    %259 = memref.load %arg7[%c1_176, %c18_177] : memref<2x49xf32, #tpu.memory_space<smem>>
    %c0_178 = arith.constant 0 : index
    %c36_179 = arith.constant 36 : index
    %260 = vector.load %arg12[%c0_178, %c36_179] : memref<1x358xf32, #tpu.memory_space<vmem>>, vector<1x256xf32>
    %261 = vector.broadcast %259 : f32 to vector<1x256xf32>
    %262 = arith.mulf %261, %260 : vector<1x256xf32>
    %263 = arith.addf %258, %262 : vector<1x256xf32>
    %264 = arith.mulf %263, %50 : vector<1x256xf32>
    %265 = arith.addf %254, %264 : vector<1x256xf32>
    %c0_180 = arith.constant 0 : index
    %c19_181 = arith.constant 19 : index
    %266 = memref.load %arg7[%c0_180, %c19_181] : memref<2x49xf32, #tpu.memory_space<smem>>
    %c0_182 = arith.constant 0 : index
    %c37 = arith.constant 37 : index
    %267 = vector.load %arg11[%c0_182, %c37] : memref<1x358xf32, #tpu.memory_space<vmem>>, vector<1x256xf32>
    %268 = vector.broadcast %266 : f32 to vector<1x256xf32>
    %269 = arith.mulf %268, %267 : vector<1x256xf32>
    %c1_183 = arith.constant 1 : index
    %c19_184 = arith.constant 19 : index
    %270 = memref.load %arg7[%c1_183, %c19_184] : memref<2x49xf32, #tpu.memory_space<smem>>
    %c0_185 = arith.constant 0 : index
    %c37_186 = arith.constant 37 : index
    %271 = vector.load %arg12[%c0_185, %c37_186] : memref<1x358xf32, #tpu.memory_space<vmem>>, vector<1x256xf32>
    %272 = vector.broadcast %270 : f32 to vector<1x256xf32>
    %273 = arith.mulf %272, %271 : vector<1x256xf32>
    %274 = arith.addf %269, %273 : vector<1x256xf32>
    %275 = arith.mulf %274, %51 : vector<1x256xf32>
    %276 = arith.addf %265, %275 : vector<1x256xf32>
    %c0_187 = arith.constant 0 : index
    %c20_188 = arith.constant 20 : index
    %277 = memref.load %arg7[%c0_187, %c20_188] : memref<2x49xf32, #tpu.memory_space<smem>>
    %c0_189 = arith.constant 0 : index
    %c38 = arith.constant 38 : index
    %278 = vector.load %arg11[%c0_189, %c38] : memref<1x358xf32, #tpu.memory_space<vmem>>, vector<1x256xf32>
    %279 = vector.broadcast %277 : f32 to vector<1x256xf32>
    %280 = arith.mulf %279, %278 : vector<1x256xf32>
    %c1_190 = arith.constant 1 : index
    %c20_191 = arith.constant 20 : index
    %281 = memref.load %arg7[%c1_190, %c20_191] : memref<2x49xf32, #tpu.memory_space<smem>>
    %c0_192 = arith.constant 0 : index
    %c38_193 = arith.constant 38 : index
    %282 = vector.load %arg12[%c0_192, %c38_193] : memref<1x358xf32, #tpu.memory_space<vmem>>, vector<1x256xf32>
    %283 = vector.broadcast %281 : f32 to vector<1x256xf32>
    %284 = arith.mulf %283, %282 : vector<1x256xf32>
    %285 = arith.addf %280, %284 : vector<1x256xf32>
    %286 = arith.mulf %285, %52 : vector<1x256xf32>
    %287 = arith.addf %276, %286 : vector<1x256xf32>
    %c0_194 = arith.constant 0 : index
    %c21_195 = arith.constant 21 : index
    %288 = memref.load %arg7[%c0_194, %c21_195] : memref<2x49xf32, #tpu.memory_space<smem>>
    %c0_196 = arith.constant 0 : index
    %c48 = arith.constant 48 : index
    %289 = vector.load %arg11[%c0_196, %c48] : memref<1x358xf32, #tpu.memory_space<vmem>>, vector<1x256xf32>
    %290 = vector.broadcast %288 : f32 to vector<1x256xf32>
    %291 = arith.mulf %290, %289 : vector<1x256xf32>
    %c1_197 = arith.constant 1 : index
    %c21_198 = arith.constant 21 : index
    %292 = memref.load %arg7[%c1_197, %c21_198] : memref<2x49xf32, #tpu.memory_space<smem>>
    %c0_199 = arith.constant 0 : index
    %c48_200 = arith.constant 48 : index
    %293 = vector.load %arg12[%c0_199, %c48_200] : memref<1x358xf32, #tpu.memory_space<vmem>>, vector<1x256xf32>
    %294 = vector.broadcast %292 : f32 to vector<1x256xf32>
    %295 = arith.mulf %294, %293 : vector<1x256xf32>
    %296 = arith.addf %291, %295 : vector<1x256xf32>
    %297 = arith.mulf %296, %46 : vector<1x256xf32>
    %298 = arith.addf %287, %297 : vector<1x256xf32>
    %c0_201 = arith.constant 0 : index
    %c22_202 = arith.constant 22 : index
    %299 = memref.load %arg7[%c0_201, %c22_202] : memref<2x49xf32, #tpu.memory_space<smem>>
    %c0_203 = arith.constant 0 : index
    %c49 = arith.constant 49 : index
    %300 = vector.load %arg11[%c0_203, %c49] : memref<1x358xf32, #tpu.memory_space<vmem>>, vector<1x256xf32>
    %301 = vector.broadcast %299 : f32 to vector<1x256xf32>
    %302 = arith.mulf %301, %300 : vector<1x256xf32>
    %c1_204 = arith.constant 1 : index
    %c22_205 = arith.constant 22 : index
    %303 = memref.load %arg7[%c1_204, %c22_205] : memref<2x49xf32, #tpu.memory_space<smem>>
    %c0_206 = arith.constant 0 : index
    %c49_207 = arith.constant 49 : index
    %304 = vector.load %arg12[%c0_206, %c49_207] : memref<1x358xf32, #tpu.memory_space<vmem>>, vector<1x256xf32>
    %305 = vector.broadcast %303 : f32 to vector<1x256xf32>
    %306 = arith.mulf %305, %304 : vector<1x256xf32>
    %307 = arith.addf %302, %306 : vector<1x256xf32>
    %308 = arith.mulf %307, %47 : vector<1x256xf32>
    %309 = arith.addf %298, %308 : vector<1x256xf32>
    %c0_208 = arith.constant 0 : index
    %c23 = arith.constant 23 : index
    %310 = memref.load %arg7[%c0_208, %c23] : memref<2x49xf32, #tpu.memory_space<smem>>
    %c0_209 = arith.constant 0 : index
    %c50 = arith.constant 50 : index
    %311 = vector.load %arg11[%c0_209, %c50] : memref<1x358xf32, #tpu.memory_space<vmem>>, vector<1x256xf32>
    %312 = vector.broadcast %310 : f32 to vector<1x256xf32>
    %313 = arith.mulf %312, %311 : vector<1x256xf32>
    %c1_210 = arith.constant 1 : index
    %c23_211 = arith.constant 23 : index
    %314 = memref.load %arg7[%c1_210, %c23_211] : memref<2x49xf32, #tpu.memory_space<smem>>
    %c0_212 = arith.constant 0 : index
    %c50_213 = arith.constant 50 : index
    %315 = vector.load %arg12[%c0_212, %c50_213] : memref<1x358xf32, #tpu.memory_space<vmem>>, vector<1x256xf32>
    %316 = vector.broadcast %314 : f32 to vector<1x256xf32>
    %317 = arith.mulf %316, %315 : vector<1x256xf32>
    %318 = arith.addf %313, %317 : vector<1x256xf32>
    %319 = arith.mulf %318, %48 : vector<1x256xf32>
    %320 = arith.addf %309, %319 : vector<1x256xf32>
    %c0_214 = arith.constant 0 : index
    %c24 = arith.constant 24 : index
    %321 = memref.load %arg7[%c0_214, %c24] : memref<2x49xf32, #tpu.memory_space<smem>>
    %c0_215 = arith.constant 0 : index
    %c51_216 = arith.constant 51 : index
    %322 = vector.load %arg11[%c0_215, %c51_216] : memref<1x358xf32, #tpu.memory_space<vmem>>, vector<1x256xf32>
    %323 = vector.broadcast %321 : f32 to vector<1x256xf32>
    %324 = arith.mulf %323, %322 : vector<1x256xf32>
    %c1_217 = arith.constant 1 : index
    %c24_218 = arith.constant 24 : index
    %325 = memref.load %arg7[%c1_217, %c24_218] : memref<2x49xf32, #tpu.memory_space<smem>>
    %c0_219 = arith.constant 0 : index
    %c51_220 = arith.constant 51 : index
    %326 = vector.load %arg12[%c0_219, %c51_220] : memref<1x358xf32, #tpu.memory_space<vmem>>, vector<1x256xf32>
    %327 = vector.broadcast %325 : f32 to vector<1x256xf32>
    %328 = arith.mulf %327, %326 : vector<1x256xf32>
    %329 = arith.addf %324, %328 : vector<1x256xf32>
    %330 = arith.mulf %329, %49 : vector<1x256xf32>
    %331 = arith.addf %320, %330 : vector<1x256xf32>
    %c0_221 = arith.constant 0 : index
    %c25 = arith.constant 25 : index
    %332 = memref.load %arg7[%c0_221, %c25] : memref<2x49xf32, #tpu.memory_space<smem>>
    %c0_222 = arith.constant 0 : index
    %c52 = arith.constant 52 : index
    %333 = vector.load %arg11[%c0_222, %c52] : memref<1x358xf32, #tpu.memory_space<vmem>>, vector<1x256xf32>
    %334 = vector.broadcast %332 : f32 to vector<1x256xf32>
    %335 = arith.mulf %334, %333 : vector<1x256xf32>
    %c1_223 = arith.constant 1 : index
    %c25_224 = arith.constant 25 : index
    %336 = memref.load %arg7[%c1_223, %c25_224] : memref<2x49xf32, #tpu.memory_space<smem>>
    %c0_225 = arith.constant 0 : index
    %c52_226 = arith.constant 52 : index
    %337 = vector.load %arg12[%c0_225, %c52_226] : memref<1x358xf32, #tpu.memory_space<vmem>>, vector<1x256xf32>
    %338 = vector.broadcast %336 : f32 to vector<1x256xf32>
    %339 = arith.mulf %338, %337 : vector<1x256xf32>
    %340 = arith.addf %335, %339 : vector<1x256xf32>
    %341 = arith.mulf %340, %50 : vector<1x256xf32>
    %342 = arith.addf %331, %341 : vector<1x256xf32>
    %c0_227 = arith.constant 0 : index
    %c26 = arith.constant 26 : index
    %343 = memref.load %arg7[%c0_227, %c26] : memref<2x49xf32, #tpu.memory_space<smem>>
    %c0_228 = arith.constant 0 : index
    %c53 = arith.constant 53 : index
    %344 = vector.load %arg11[%c0_228, %c53] : memref<1x358xf32, #tpu.memory_space<vmem>>, vector<1x256xf32>
    %345 = vector.broadcast %343 : f32 to vector<1x256xf32>
    %346 = arith.mulf %345, %344 : vector<1x256xf32>
    %c1_229 = arith.constant 1 : index
    %c26_230 = arith.constant 26 : index
    %347 = memref.load %arg7[%c1_229, %c26_230] : memref<2x49xf32, #tpu.memory_space<smem>>
    %c0_231 = arith.constant 0 : index
    %c53_232 = arith.constant 53 : index
    %348 = vector.load %arg12[%c0_231, %c53_232] : memref<1x358xf32, #tpu.memory_space<vmem>>, vector<1x256xf32>
    %349 = vector.broadcast %347 : f32 to vector<1x256xf32>
    %350 = arith.mulf %349, %348 : vector<1x256xf32>
    %351 = arith.addf %346, %350 : vector<1x256xf32>
    %352 = arith.mulf %351, %51 : vector<1x256xf32>
    %353 = arith.addf %342, %352 : vector<1x256xf32>
    %c0_233 = arith.constant 0 : index
    %c27 = arith.constant 27 : index
    %354 = memref.load %arg7[%c0_233, %c27] : memref<2x49xf32, #tpu.memory_space<smem>>
    %c0_234 = arith.constant 0 : index
    %c54 = arith.constant 54 : index
    %355 = vector.load %arg11[%c0_234, %c54] : memref<1x358xf32, #tpu.memory_space<vmem>>, vector<1x256xf32>
    %356 = vector.broadcast %354 : f32 to vector<1x256xf32>
    %357 = arith.mulf %356, %355 : vector<1x256xf32>
    %c1_235 = arith.constant 1 : index
    %c27_236 = arith.constant 27 : index
    %358 = memref.load %arg7[%c1_235, %c27_236] : memref<2x49xf32, #tpu.memory_space<smem>>
    %c0_237 = arith.constant 0 : index
    %c54_238 = arith.constant 54 : index
    %359 = vector.load %arg12[%c0_237, %c54_238] : memref<1x358xf32, #tpu.memory_space<vmem>>, vector<1x256xf32>
    %360 = vector.broadcast %358 : f32 to vector<1x256xf32>
    %361 = arith.mulf %360, %359 : vector<1x256xf32>
    %362 = arith.addf %357, %361 : vector<1x256xf32>
    %363 = arith.mulf %362, %52 : vector<1x256xf32>
    %364 = arith.addf %353, %363 : vector<1x256xf32>
    %c0_239 = arith.constant 0 : index
    %c28 = arith.constant 28 : index
    %365 = memref.load %arg7[%c0_239, %c28] : memref<2x49xf32, #tpu.memory_space<smem>>
    %c0_240 = arith.constant 0 : index
    %c64 = arith.constant 64 : index
    %366 = vector.load %arg11[%c0_240, %c64] : memref<1x358xf32, #tpu.memory_space<vmem>>, vector<1x256xf32>
    %367 = vector.broadcast %365 : f32 to vector<1x256xf32>
    %368 = arith.mulf %367, %366 : vector<1x256xf32>
    %c1_241 = arith.constant 1 : index
    %c28_242 = arith.constant 28 : index
    %369 = memref.load %arg7[%c1_241, %c28_242] : memref<2x49xf32, #tpu.memory_space<smem>>
    %c0_243 = arith.constant 0 : index
    %c64_244 = arith.constant 64 : index
    %370 = vector.load %arg12[%c0_243, %c64_244] : memref<1x358xf32, #tpu.memory_space<vmem>>, vector<1x256xf32>
    %371 = vector.broadcast %369 : f32 to vector<1x256xf32>
    %372 = arith.mulf %371, %370 : vector<1x256xf32>
    %373 = arith.addf %368, %372 : vector<1x256xf32>
    %374 = arith.mulf %373, %46 : vector<1x256xf32>
    %375 = arith.addf %364, %374 : vector<1x256xf32>
    %c0_245 = arith.constant 0 : index
    %c29 = arith.constant 29 : index
    %376 = memref.load %arg7[%c0_245, %c29] : memref<2x49xf32, #tpu.memory_space<smem>>
    %c0_246 = arith.constant 0 : index
    %c65 = arith.constant 65 : index
    %377 = vector.load %arg11[%c0_246, %c65] : memref<1x358xf32, #tpu.memory_space<vmem>>, vector<1x256xf32>
    %378 = vector.broadcast %376 : f32 to vector<1x256xf32>
    %379 = arith.mulf %378, %377 : vector<1x256xf32>
    %c1_247 = arith.constant 1 : index
    %c29_248 = arith.constant 29 : index
    %380 = memref.load %arg7[%c1_247, %c29_248] : memref<2x49xf32, #tpu.memory_space<smem>>
    %c0_249 = arith.constant 0 : index
    %c65_250 = arith.constant 65 : index
    %381 = vector.load %arg12[%c0_249, %c65_250] : memref<1x358xf32, #tpu.memory_space<vmem>>, vector<1x256xf32>
    %382 = vector.broadcast %380 : f32 to vector<1x256xf32>
    %383 = arith.mulf %382, %381 : vector<1x256xf32>
    %384 = arith.addf %379, %383 : vector<1x256xf32>
    %385 = arith.mulf %384, %47 : vector<1x256xf32>
    %386 = arith.addf %375, %385 : vector<1x256xf32>
    %c0_251 = arith.constant 0 : index
    %c30 = arith.constant 30 : index
    %387 = memref.load %arg7[%c0_251, %c30] : memref<2x49xf32, #tpu.memory_space<smem>>
    %c0_252 = arith.constant 0 : index
    %c66 = arith.constant 66 : index
    %388 = vector.load %arg11[%c0_252, %c66] : memref<1x358xf32, #tpu.memory_space<vmem>>, vector<1x256xf32>
    %389 = vector.broadcast %387 : f32 to vector<1x256xf32>
    %390 = arith.mulf %389, %388 : vector<1x256xf32>
    %c1_253 = arith.constant 1 : index
    %c30_254 = arith.constant 30 : index
    %391 = memref.load %arg7[%c1_253, %c30_254] : memref<2x49xf32, #tpu.memory_space<smem>>
    %c0_255 = arith.constant 0 : index
    %c66_256 = arith.constant 66 : index
    %392 = vector.load %arg12[%c0_255, %c66_256] : memref<1x358xf32, #tpu.memory_space<vmem>>, vector<1x256xf32>
    %393 = vector.broadcast %391 : f32 to vector<1x256xf32>
    %394 = arith.mulf %393, %392 : vector<1x256xf32>
    %395 = arith.addf %390, %394 : vector<1x256xf32>
    %396 = arith.mulf %395, %48 : vector<1x256xf32>
    %397 = arith.addf %386, %396 : vector<1x256xf32>
    %c0_257 = arith.constant 0 : index
    %c31 = arith.constant 31 : index
    %398 = memref.load %arg7[%c0_257, %c31] : memref<2x49xf32, #tpu.memory_space<smem>>
    %c0_258 = arith.constant 0 : index
    %c67 = arith.constant 67 : index
    %399 = vector.load %arg11[%c0_258, %c67] : memref<1x358xf32, #tpu.memory_space<vmem>>, vector<1x256xf32>
    %400 = vector.broadcast %398 : f32 to vector<1x256xf32>
    %401 = arith.mulf %400, %399 : vector<1x256xf32>
    %c1_259 = arith.constant 1 : index
    %c31_260 = arith.constant 31 : index
    %402 = memref.load %arg7[%c1_259, %c31_260] : memref<2x49xf32, #tpu.memory_space<smem>>
    %c0_261 = arith.constant 0 : index
    %c67_262 = arith.constant 67 : index
    %403 = vector.load %arg12[%c0_261, %c67_262] : memref<1x358xf32, #tpu.memory_space<vmem>>, vector<1x256xf32>
    %404 = vector.broadcast %402 : f32 to vector<1x256xf32>
    %405 = arith.mulf %404, %403 : vector<1x256xf32>
    %406 = arith.addf %401, %405 : vector<1x256xf32>
    %407 = arith.mulf %406, %49 : vector<1x256xf32>
    %408 = arith.addf %397, %407 : vector<1x256xf32>
    %c0_263 = arith.constant 0 : index
    %c32_264 = arith.constant 32 : index
    %409 = memref.load %arg7[%c0_263, %c32_264] : memref<2x49xf32, #tpu.memory_space<smem>>
    %c0_265 = arith.constant 0 : index
    %c68 = arith.constant 68 : index
    %410 = vector.load %arg11[%c0_265, %c68] : memref<1x358xf32, #tpu.memory_space<vmem>>, vector<1x256xf32>
    %411 = vector.broadcast %409 : f32 to vector<1x256xf32>
    %412 = arith.mulf %411, %410 : vector<1x256xf32>
    %c1_266 = arith.constant 1 : index
    %c32_267 = arith.constant 32 : index
    %413 = memref.load %arg7[%c1_266, %c32_267] : memref<2x49xf32, #tpu.memory_space<smem>>
    %c0_268 = arith.constant 0 : index
    %c68_269 = arith.constant 68 : index
    %414 = vector.load %arg12[%c0_268, %c68_269] : memref<1x358xf32, #tpu.memory_space<vmem>>, vector<1x256xf32>
    %415 = vector.broadcast %413 : f32 to vector<1x256xf32>
    %416 = arith.mulf %415, %414 : vector<1x256xf32>
    %417 = arith.addf %412, %416 : vector<1x256xf32>
    %418 = arith.mulf %417, %50 : vector<1x256xf32>
    %419 = arith.addf %408, %418 : vector<1x256xf32>
    %c0_270 = arith.constant 0 : index
    %c33_271 = arith.constant 33 : index
    %420 = memref.load %arg7[%c0_270, %c33_271] : memref<2x49xf32, #tpu.memory_space<smem>>
    %c0_272 = arith.constant 0 : index
    %c69 = arith.constant 69 : index
    %421 = vector.load %arg11[%c0_272, %c69] : memref<1x358xf32, #tpu.memory_space<vmem>>, vector<1x256xf32>
    %422 = vector.broadcast %420 : f32 to vector<1x256xf32>
    %423 = arith.mulf %422, %421 : vector<1x256xf32>
    %c1_273 = arith.constant 1 : index
    %c33_274 = arith.constant 33 : index
    %424 = memref.load %arg7[%c1_273, %c33_274] : memref<2x49xf32, #tpu.memory_space<smem>>
    %c0_275 = arith.constant 0 : index
    %c69_276 = arith.constant 69 : index
    %425 = vector.load %arg12[%c0_275, %c69_276] : memref<1x358xf32, #tpu.memory_space<vmem>>, vector<1x256xf32>
    %426 = vector.broadcast %424 : f32 to vector<1x256xf32>
    %427 = arith.mulf %426, %425 : vector<1x256xf32>
    %428 = arith.addf %423, %427 : vector<1x256xf32>
    %429 = arith.mulf %428, %51 : vector<1x256xf32>
    %430 = arith.addf %419, %429 : vector<1x256xf32>
    %c0_277 = arith.constant 0 : index
    %c34_278 = arith.constant 34 : index
    %431 = memref.load %arg7[%c0_277, %c34_278] : memref<2x49xf32, #tpu.memory_space<smem>>
    %c0_279 = arith.constant 0 : index
    %c70 = arith.constant 70 : index
    %432 = vector.load %arg11[%c0_279, %c70] : memref<1x358xf32, #tpu.memory_space<vmem>>, vector<1x256xf32>
    %433 = vector.broadcast %431 : f32 to vector<1x256xf32>
    %434 = arith.mulf %433, %432 : vector<1x256xf32>
    %c1_280 = arith.constant 1 : index
    %c34_281 = arith.constant 34 : index
    %435 = memref.load %arg7[%c1_280, %c34_281] : memref<2x49xf32, #tpu.memory_space<smem>>
    %c0_282 = arith.constant 0 : index
    %c70_283 = arith.constant 70 : index
    %436 = vector.load %arg12[%c0_282, %c70_283] : memref<1x358xf32, #tpu.memory_space<vmem>>, vector<1x256xf32>
    %437 = vector.broadcast %435 : f32 to vector<1x256xf32>
    %438 = arith.mulf %437, %436 : vector<1x256xf32>
    %439 = arith.addf %434, %438 : vector<1x256xf32>
    %440 = arith.mulf %439, %52 : vector<1x256xf32>
    %441 = arith.addf %430, %440 : vector<1x256xf32>
    %c0_284 = arith.constant 0 : index
    %c35_285 = arith.constant 35 : index
    %442 = memref.load %arg7[%c0_284, %c35_285] : memref<2x49xf32, #tpu.memory_space<smem>>
    %c0_286 = arith.constant 0 : index
    %c80 = arith.constant 80 : index
    %443 = vector.load %arg11[%c0_286, %c80] : memref<1x358xf32, #tpu.memory_space<vmem>>, vector<1x256xf32>
    %444 = vector.broadcast %442 : f32 to vector<1x256xf32>
    %445 = arith.mulf %444, %443 : vector<1x256xf32>
    %c1_287 = arith.constant 1 : index
    %c35_288 = arith.constant 35 : index
    %446 = memref.load %arg7[%c1_287, %c35_288] : memref<2x49xf32, #tpu.memory_space<smem>>
    %c0_289 = arith.constant 0 : index
    %c80_290 = arith.constant 80 : index
    %447 = vector.load %arg12[%c0_289, %c80_290] : memref<1x358xf32, #tpu.memory_space<vmem>>, vector<1x256xf32>
    %448 = vector.broadcast %446 : f32 to vector<1x256xf32>
    %449 = arith.mulf %448, %447 : vector<1x256xf32>
    %450 = arith.addf %445, %449 : vector<1x256xf32>
    %451 = arith.mulf %450, %46 : vector<1x256xf32>
    %452 = arith.addf %441, %451 : vector<1x256xf32>
    %c0_291 = arith.constant 0 : index
    %c36_292 = arith.constant 36 : index
    %453 = memref.load %arg7[%c0_291, %c36_292] : memref<2x49xf32, #tpu.memory_space<smem>>
    %c0_293 = arith.constant 0 : index
    %c81 = arith.constant 81 : index
    %454 = vector.load %arg11[%c0_293, %c81] : memref<1x358xf32, #tpu.memory_space<vmem>>, vector<1x256xf32>
    %455 = vector.broadcast %453 : f32 to vector<1x256xf32>
    %456 = arith.mulf %455, %454 : vector<1x256xf32>
    %c1_294 = arith.constant 1 : index
    %c36_295 = arith.constant 36 : index
    %457 = memref.load %arg7[%c1_294, %c36_295] : memref<2x49xf32, #tpu.memory_space<smem>>
    %c0_296 = arith.constant 0 : index
    %c81_297 = arith.constant 81 : index
    %458 = vector.load %arg12[%c0_296, %c81_297] : memref<1x358xf32, #tpu.memory_space<vmem>>, vector<1x256xf32>
    %459 = vector.broadcast %457 : f32 to vector<1x256xf32>
    %460 = arith.mulf %459, %458 : vector<1x256xf32>
    %461 = arith.addf %456, %460 : vector<1x256xf32>
    %462 = arith.mulf %461, %47 : vector<1x256xf32>
    %463 = arith.addf %452, %462 : vector<1x256xf32>
    %c0_298 = arith.constant 0 : index
    %c37_299 = arith.constant 37 : index
    %464 = memref.load %arg7[%c0_298, %c37_299] : memref<2x49xf32, #tpu.memory_space<smem>>
    %c0_300 = arith.constant 0 : index
    %c82 = arith.constant 82 : index
    %465 = vector.load %arg11[%c0_300, %c82] : memref<1x358xf32, #tpu.memory_space<vmem>>, vector<1x256xf32>
    %466 = vector.broadcast %464 : f32 to vector<1x256xf32>
    %467 = arith.mulf %466, %465 : vector<1x256xf32>
    %c1_301 = arith.constant 1 : index
    %c37_302 = arith.constant 37 : index
    %468 = memref.load %arg7[%c1_301, %c37_302] : memref<2x49xf32, #tpu.memory_space<smem>>
    %c0_303 = arith.constant 0 : index
    %c82_304 = arith.constant 82 : index
    %469 = vector.load %arg12[%c0_303, %c82_304] : memref<1x358xf32, #tpu.memory_space<vmem>>, vector<1x256xf32>
    %470 = vector.broadcast %468 : f32 to vector<1x256xf32>
    %471 = arith.mulf %470, %469 : vector<1x256xf32>
    %472 = arith.addf %467, %471 : vector<1x256xf32>
    %473 = arith.mulf %472, %48 : vector<1x256xf32>
    %474 = arith.addf %463, %473 : vector<1x256xf32>
    %c0_305 = arith.constant 0 : index
    %c38_306 = arith.constant 38 : index
    %475 = memref.load %arg7[%c0_305, %c38_306] : memref<2x49xf32, #tpu.memory_space<smem>>
    %c0_307 = arith.constant 0 : index
    %c83 = arith.constant 83 : index
    %476 = vector.load %arg11[%c0_307, %c83] : memref<1x358xf32, #tpu.memory_space<vmem>>, vector<1x256xf32>
    %477 = vector.broadcast %475 : f32 to vector<1x256xf32>
    %478 = arith.mulf %477, %476 : vector<1x256xf32>
    %c1_308 = arith.constant 1 : index
    %c38_309 = arith.constant 38 : index
    %479 = memref.load %arg7[%c1_308, %c38_309] : memref<2x49xf32, #tpu.memory_space<smem>>
    %c0_310 = arith.constant 0 : index
    %c83_311 = arith.constant 83 : index
    %480 = vector.load %arg12[%c0_310, %c83_311] : memref<1x358xf32, #tpu.memory_space<vmem>>, vector<1x256xf32>
    %481 = vector.broadcast %479 : f32 to vector<1x256xf32>
    %482 = arith.mulf %481, %480 : vector<1x256xf32>
    %483 = arith.addf %478, %482 : vector<1x256xf32>
    %484 = arith.mulf %483, %49 : vector<1x256xf32>
    %485 = arith.addf %474, %484 : vector<1x256xf32>
    %c0_312 = arith.constant 0 : index
    %c39 = arith.constant 39 : index
    %486 = memref.load %arg7[%c0_312, %c39] : memref<2x49xf32, #tpu.memory_space<smem>>
    %c0_313 = arith.constant 0 : index
    %c84 = arith.constant 84 : index
    %487 = vector.load %arg11[%c0_313, %c84] : memref<1x358xf32, #tpu.memory_space<vmem>>, vector<1x256xf32>
    %488 = vector.broadcast %486 : f32 to vector<1x256xf32>
    %489 = arith.mulf %488, %487 : vector<1x256xf32>
    %c1_314 = arith.constant 1 : index
    %c39_315 = arith.constant 39 : index
    %490 = memref.load %arg7[%c1_314, %c39_315] : memref<2x49xf32, #tpu.memory_space<smem>>
    %c0_316 = arith.constant 0 : index
    %c84_317 = arith.constant 84 : index
    %491 = vector.load %arg12[%c0_316, %c84_317] : memref<1x358xf32, #tpu.memory_space<vmem>>, vector<1x256xf32>
    %492 = vector.broadcast %490 : f32 to vector<1x256xf32>
    %493 = arith.mulf %492, %491 : vector<1x256xf32>
    %494 = arith.addf %489, %493 : vector<1x256xf32>
    %495 = arith.mulf %494, %50 : vector<1x256xf32>
    %496 = arith.addf %485, %495 : vector<1x256xf32>
    %c0_318 = arith.constant 0 : index
    %c40 = arith.constant 40 : index
    %497 = memref.load %arg7[%c0_318, %c40] : memref<2x49xf32, #tpu.memory_space<smem>>
    %c0_319 = arith.constant 0 : index
    %c85 = arith.constant 85 : index
    %498 = vector.load %arg11[%c0_319, %c85] : memref<1x358xf32, #tpu.memory_space<vmem>>, vector<1x256xf32>
    %499 = vector.broadcast %497 : f32 to vector<1x256xf32>
    %500 = arith.mulf %499, %498 : vector<1x256xf32>
    %c1_320 = arith.constant 1 : index
    %c40_321 = arith.constant 40 : index
    %501 = memref.load %arg7[%c1_320, %c40_321] : memref<2x49xf32, #tpu.memory_space<smem>>
    %c0_322 = arith.constant 0 : index
    %c85_323 = arith.constant 85 : index
    %502 = vector.load %arg12[%c0_322, %c85_323] : memref<1x358xf32, #tpu.memory_space<vmem>>, vector<1x256xf32>
    %503 = vector.broadcast %501 : f32 to vector<1x256xf32>
    %504 = arith.mulf %503, %502 : vector<1x256xf32>
    %505 = arith.addf %500, %504 : vector<1x256xf32>
    %506 = arith.mulf %505, %51 : vector<1x256xf32>
    %507 = arith.addf %496, %506 : vector<1x256xf32>
    %c0_324 = arith.constant 0 : index
    %c41 = arith.constant 41 : index
    %508 = memref.load %arg7[%c0_324, %c41] : memref<2x49xf32, #tpu.memory_space<smem>>
    %c0_325 = arith.constant 0 : index
    %c86 = arith.constant 86 : index
    %509 = vector.load %arg11[%c0_325, %c86] : memref<1x358xf32, #tpu.memory_space<vmem>>, vector<1x256xf32>
    %510 = vector.broadcast %508 : f32 to vector<1x256xf32>
    %511 = arith.mulf %510, %509 : vector<1x256xf32>
    %c1_326 = arith.constant 1 : index
    %c41_327 = arith.constant 41 : index
    %512 = memref.load %arg7[%c1_326, %c41_327] : memref<2x49xf32, #tpu.memory_space<smem>>
    %c0_328 = arith.constant 0 : index
    %c86_329 = arith.constant 86 : index
    %513 = vector.load %arg12[%c0_328, %c86_329] : memref<1x358xf32, #tpu.memory_space<vmem>>, vector<1x256xf32>
    %514 = vector.broadcast %512 : f32 to vector<1x256xf32>
    %515 = arith.mulf %514, %513 : vector<1x256xf32>
    %516 = arith.addf %511, %515 : vector<1x256xf32>
    %517 = arith.mulf %516, %52 : vector<1x256xf32>
    %518 = arith.addf %507, %517 : vector<1x256xf32>
    %c0_330 = arith.constant 0 : index
    %c42 = arith.constant 42 : index
    %519 = memref.load %arg7[%c0_330, %c42] : memref<2x49xf32, #tpu.memory_space<smem>>
    %c0_331 = arith.constant 0 : index
    %c96 = arith.constant 96 : index
    %520 = vector.load %arg11[%c0_331, %c96] : memref<1x358xf32, #tpu.memory_space<vmem>>, vector<1x256xf32>
    %521 = vector.broadcast %519 : f32 to vector<1x256xf32>
    %522 = arith.mulf %521, %520 : vector<1x256xf32>
    %c1_332 = arith.constant 1 : index
    %c42_333 = arith.constant 42 : index
    %523 = memref.load %arg7[%c1_332, %c42_333] : memref<2x49xf32, #tpu.memory_space<smem>>
    %c0_334 = arith.constant 0 : index
    %c96_335 = arith.constant 96 : index
    %524 = vector.load %arg12[%c0_334, %c96_335] : memref<1x358xf32, #tpu.memory_space<vmem>>, vector<1x256xf32>
    %525 = vector.broadcast %523 : f32 to vector<1x256xf32>
    %526 = arith.mulf %525, %524 : vector<1x256xf32>
    %527 = arith.addf %522, %526 : vector<1x256xf32>
    %528 = arith.mulf %527, %46 : vector<1x256xf32>
    %529 = arith.addf %518, %528 : vector<1x256xf32>
    %c0_336 = arith.constant 0 : index
    %c43 = arith.constant 43 : index
    %530 = memref.load %arg7[%c0_336, %c43] : memref<2x49xf32, #tpu.memory_space<smem>>
    %c0_337 = arith.constant 0 : index
    %c97 = arith.constant 97 : index
    %531 = vector.load %arg11[%c0_337, %c97] : memref<1x358xf32, #tpu.memory_space<vmem>>, vector<1x256xf32>
    %532 = vector.broadcast %530 : f32 to vector<1x256xf32>
    %533 = arith.mulf %532, %531 : vector<1x256xf32>
    %c1_338 = arith.constant 1 : index
    %c43_339 = arith.constant 43 : index
    %534 = memref.load %arg7[%c1_338, %c43_339] : memref<2x49xf32, #tpu.memory_space<smem>>
    %c0_340 = arith.constant 0 : index
    %c97_341 = arith.constant 97 : index
    %535 = vector.load %arg12[%c0_340, %c97_341] : memref<1x358xf32, #tpu.memory_space<vmem>>, vector<1x256xf32>
    %536 = vector.broadcast %534 : f32 to vector<1x256xf32>
    %537 = arith.mulf %536, %535 : vector<1x256xf32>
    %538 = arith.addf %533, %537 : vector<1x256xf32>
    %539 = arith.mulf %538, %47 : vector<1x256xf32>
    %540 = arith.addf %529, %539 : vector<1x256xf32>
    %c0_342 = arith.constant 0 : index
    %c44 = arith.constant 44 : index
    %541 = memref.load %arg7[%c0_342, %c44] : memref<2x49xf32, #tpu.memory_space<smem>>
    %c0_343 = arith.constant 0 : index
    %c98 = arith.constant 98 : index
    %542 = vector.load %arg11[%c0_343, %c98] : memref<1x358xf32, #tpu.memory_space<vmem>>, vector<1x256xf32>
    %543 = vector.broadcast %541 : f32 to vector<1x256xf32>
    %544 = arith.mulf %543, %542 : vector<1x256xf32>
    %c1_344 = arith.constant 1 : index
    %c44_345 = arith.constant 44 : index
    %545 = memref.load %arg7[%c1_344, %c44_345] : memref<2x49xf32, #tpu.memory_space<smem>>
    %c0_346 = arith.constant 0 : index
    %c98_347 = arith.constant 98 : index
    %546 = vector.load %arg12[%c0_346, %c98_347] : memref<1x358xf32, #tpu.memory_space<vmem>>, vector<1x256xf32>
    %547 = vector.broadcast %545 : f32 to vector<1x256xf32>
    %548 = arith.mulf %547, %546 : vector<1x256xf32>
    %549 = arith.addf %544, %548 : vector<1x256xf32>
    %550 = arith.mulf %549, %48 : vector<1x256xf32>
    %551 = arith.addf %540, %550 : vector<1x256xf32>
    %c0_348 = arith.constant 0 : index
    %c45 = arith.constant 45 : index
    %552 = memref.load %arg7[%c0_348, %c45] : memref<2x49xf32, #tpu.memory_space<smem>>
    %c0_349 = arith.constant 0 : index
    %c99 = arith.constant 99 : index
    %553 = vector.load %arg11[%c0_349, %c99] : memref<1x358xf32, #tpu.memory_space<vmem>>, vector<1x256xf32>
    %554 = vector.broadcast %552 : f32 to vector<1x256xf32>
    %555 = arith.mulf %554, %553 : vector<1x256xf32>
    %c1_350 = arith.constant 1 : index
    %c45_351 = arith.constant 45 : index
    %556 = memref.load %arg7[%c1_350, %c45_351] : memref<2x49xf32, #tpu.memory_space<smem>>
    %c0_352 = arith.constant 0 : index
    %c99_353 = arith.constant 99 : index
    %557 = vector.load %arg12[%c0_352, %c99_353] : memref<1x358xf32, #tpu.memory_space<vmem>>, vector<1x256xf32>
    %558 = vector.broadcast %556 : f32 to vector<1x256xf32>
    %559 = arith.mulf %558, %557 : vector<1x256xf32>
    %560 = arith.addf %555, %559 : vector<1x256xf32>
    %561 = arith.mulf %560, %49 : vector<1x256xf32>
    %562 = arith.addf %551, %561 : vector<1x256xf32>
    %c0_354 = arith.constant 0 : index
    %c46 = arith.constant 46 : index
    %563 = memref.load %arg7[%c0_354, %c46] : memref<2x49xf32, #tpu.memory_space<smem>>
    %c0_355 = arith.constant 0 : index
    %c100 = arith.constant 100 : index
    %564 = vector.load %arg11[%c0_355, %c100] : memref<1x358xf32, #tpu.memory_space<vmem>>, vector<1x256xf32>
    %565 = vector.broadcast %563 : f32 to vector<1x256xf32>
    %566 = arith.mulf %565, %564 : vector<1x256xf32>
    %c1_356 = arith.constant 1 : index
    %c46_357 = arith.constant 46 : index
    %567 = memref.load %arg7[%c1_356, %c46_357] : memref<2x49xf32, #tpu.memory_space<smem>>
    %c0_358 = arith.constant 0 : index
    %c100_359 = arith.constant 100 : index
    %568 = vector.load %arg12[%c0_358, %c100_359] : memref<1x358xf32, #tpu.memory_space<vmem>>, vector<1x256xf32>
    %569 = vector.broadcast %567 : f32 to vector<1x256xf32>
    %570 = arith.mulf %569, %568 : vector<1x256xf32>
    %571 = arith.addf %566, %570 : vector<1x256xf32>
    %572 = arith.mulf %571, %50 : vector<1x256xf32>
    %573 = arith.addf %562, %572 : vector<1x256xf32>
    %c0_360 = arith.constant 0 : index
    %c47 = arith.constant 47 : index
    %574 = memref.load %arg7[%c0_360, %c47] : memref<2x49xf32, #tpu.memory_space<smem>>
    %c0_361 = arith.constant 0 : index
    %c101 = arith.constant 101 : index
    %575 = vector.load %arg11[%c0_361, %c101] : memref<1x358xf32, #tpu.memory_space<vmem>>, vector<1x256xf32>
    %576 = vector.broadcast %574 : f32 to vector<1x256xf32>
    %577 = arith.mulf %576, %575 : vector<1x256xf32>
    %c1_362 = arith.constant 1 : index
    %c47_363 = arith.constant 47 : index
    %578 = memref.load %arg7[%c1_362, %c47_363] : memref<2x49xf32, #tpu.memory_space<smem>>
    %c0_364 = arith.constant 0 : index
    %c101_365 = arith.constant 101 : index
    %579 = vector.load %arg12[%c0_364, %c101_365] : memref<1x358xf32, #tpu.memory_space<vmem>>, vector<1x256xf32>
    %580 = vector.broadcast %578 : f32 to vector<1x256xf32>
    %581 = arith.mulf %580, %579 : vector<1x256xf32>
    %582 = arith.addf %577, %581 : vector<1x256xf32>
    %583 = arith.mulf %582, %51 : vector<1x256xf32>
    %584 = arith.addf %573, %583 : vector<1x256xf32>
    %c0_366 = arith.constant 0 : index
    %c48_367 = arith.constant 48 : index
    %585 = memref.load %arg7[%c0_366, %c48_367] : memref<2x49xf32, #tpu.memory_space<smem>>
    %c0_368 = arith.constant 0 : index
    %c102 = arith.constant 102 : index
    %586 = vector.load %arg11[%c0_368, %c102] : memref<1x358xf32, #tpu.memory_space<vmem>>, vector<1x256xf32>
    %587 = vector.broadcast %585 : f32 to vector<1x256xf32>
    %588 = arith.mulf %587, %586 : vector<1x256xf32>
    %c1_369 = arith.constant 1 : index
    %c48_370 = arith.constant 48 : index
    %589 = memref.load %arg7[%c1_369, %c48_370] : memref<2x49xf32, #tpu.memory_space<smem>>
    %c0_371 = arith.constant 0 : index
    %c102_372 = arith.constant 102 : index
    %590 = vector.load %arg12[%c0_371, %c102_372] : memref<1x358xf32, #tpu.memory_space<vmem>>, vector<1x256xf32>
    %591 = vector.broadcast %589 : f32 to vector<1x256xf32>
    %592 = arith.mulf %591, %590 : vector<1x256xf32>
    %593 = arith.addf %588, %592 : vector<1x256xf32>
    %594 = arith.mulf %593, %52 : vector<1x256xf32>
    %595 = arith.addf %584, %594 : vector<1x256xf32>
    %cst_373 = arith.constant 5.000000e-01 : f32
    %596 = vector.broadcast %cst_373 : f32 to vector<1x256xf32>
    %597 = arith.mulf %596, %595 : vector<1x256xf32>
    %598 = math.tanh %597 : vector<1x256xf32>
    %cst_374 = arith.constant 1.000000e+00 : f32
    %599 = vector.broadcast %cst_374 : f32 to vector<1x256xf32>
    %600 = arith.addf %598, %599 : vector<1x256xf32>
    %cst_375 = arith.constant 5.000000e-01 : f32
    %601 = vector.broadcast %cst_375 : f32 to vector<1x256xf32>
    %602 = arith.mulf %601, %600 : vector<1x256xf32>
    %c0_376 = arith.constant 0 : index
    %c0_377 = arith.constant 0 : index
    %c0_378 = arith.constant 0 : index
    %603 = vector.load %arg1[%c0_376, %c0_377, %c0_378] : memref<1x16x256xf32, #tpu.memory_space<vmem>>, vector<1x16x256xf32>
    %604 = vector.shape_cast %603 : vector<1x16x256xf32> to vector<16x256xf32>
    %605 = vector.broadcast %45 : vector<16x1xf32> to vector<16x256xf32>
    %606 = arith.mulf %604, %605 : vector<16x256xf32>
    %cst_379 = arith.constant 5.000000e-01 : f32
    %607 = vector.broadcast %cst_379 : f32 to vector<16x256xf32>
    %608 = arith.mulf %607, %606 : vector<16x256xf32>
    %609 = math.tanh %608 : vector<16x256xf32>
    %cst_380 = arith.constant 1.000000e+00 : f32
    %610 = vector.broadcast %cst_380 : f32 to vector<16x256xf32>
    %611 = arith.addf %609, %610 : vector<16x256xf32>
    %cst_381 = arith.constant 5.000000e-01 : f32
    %612 = vector.broadcast %cst_381 : f32 to vector<16x256xf32>
    %613 = arith.mulf %612, %611 : vector<16x256xf32>
    %614 = vector.broadcast %602 : vector<1x256xf32> to vector<16x256xf32>
    %615 = arith.mulf %604, %614 : vector<16x256xf32>
    %cst_382 = arith.constant 5.000000e-01 : f32
    %616 = vector.broadcast %cst_382 : f32 to vector<16x256xf32>
    %617 = arith.mulf %616, %615 : vector<16x256xf32>
    %618 = math.tanh %617 : vector<16x256xf32>
    %cst_383 = arith.constant 1.000000e+00 : f32
    %619 = vector.broadcast %cst_383 : f32 to vector<16x256xf32>
    %620 = arith.addf %618, %619 : vector<16x256xf32>
    %cst_384 = arith.constant 5.000000e-01 : f32
    %621 = vector.broadcast %cst_384 : f32 to vector<16x256xf32>
    %622 = arith.mulf %621, %620 : vector<16x256xf32>
    %623 = arith.mulf %613, %622 : vector<16x256xf32>
    %c0_385 = arith.constant 0 : index
    %c0_386 = arith.constant 0 : index
    %c0_387 = arith.constant 0 : index
    %624 = vector.load %arg9[%c0_385, %c0_386, %c0_387] : memref<1x16x256xf32, #tpu.memory_space<vmem>>, vector<1x16x256xf32>
    %625 = vector.shape_cast %624 : vector<1x16x256xf32> to vector<16x256xf32>
    %626 = vector.shape_cast %623 : vector<16x256xf32> to vector<1x16x256xf32>
    tpu.vector_store %arg9[%c0_385, %c0_386, %c0_387], %626 {strides = array<i32>} : memref<1x16x256xf32, #tpu.memory_space<vmem>>, vector<1x16x256xf32>,
    return
  }
  func.func @transform_0(%arg0: i32) -> (i32, i32, i32) {
    %c0_i32 = arith.constant 0 : i32
    %c0_i32_0 = arith.constant 0 : i32
    %c0_i32_1 = arith.constant 0 : i32
    return %arg0, %c0_i32, %c0_i32_0 : i32, i32, i32
  }
  func.func @transform_1(%arg0: i32) -> (i32, i32) {
    %c0_i32 = arith.constant 0 : i32
    %c0_i32_0 = arith.constant 0 : i32
    %c0_i32_1 = arith.constant 0 : i32
    return %c0_i32, %c0_i32_0 : i32, i32
  }
  func.func @transform_2(%arg0: i32) -> (i32, i32) {
    %c0_i32 = arith.constant 0 : i32
    %c0_i32_0 = arith.constant 0 : i32
    %c0_i32_1 = arith.constant 0 : i32
    return %c0_i32, %c0_i32_0 : i32, i32
  }
  func.func @transform_3(%arg0: i32) -> (i32, i32) {
    %c0_i32 = arith.constant 0 : i32
    %c0_i32_0 = arith.constant 0 : i32
    %c0_i32_1 = arith.constant 0 : i32
    return %c0_i32, %c0_i32_0 : i32, i32
  }
  func.func @transform_4(%arg0: i32) -> (i32, i32) {
    %c0_i32 = arith.constant 0 : i32
    %c0_i32_0 = arith.constant 0 : i32
    %c0_i32_1 = arith.constant 0 : i32
    return %c0_i32, %c0_i32_0 : i32, i32
  }
  func.func @transform_5(%arg0: i32) -> (i32, i32) {
    %c0_i32 = arith.constant 0 : i32
    %c0_i32_0 = arith.constant 0 : i32
    %c0_i32_1 = arith.constant 0 : i32
    return %c0_i32, %c0_i32_0 : i32, i32
  }
  func.func @transform_6(%arg0: i32) -> (i32, i32) {
    %c0_i32 = arith.constant 0 : i32
    %c0_i32_0 = arith.constant 0 : i32
    %c0_i32_1 = arith.constant 0 : i32
    return %c0_i32, %c0_i32_0 : i32, i32
  }
  func.func @transform_7(%arg0: i32) -> (i32, i32) {
    %c0_i32 = arith.constant 0 : i32
    %c0_i32_0 = arith.constant 0 : i32
    %c0_i32_1 = arith.constant 0 : i32
    return %c0_i32, %c0_i32_0 : i32, i32
  }
  func.func @transform_8(%arg0: i32) -> (i32, i32, i32) {
    %c0_i32 = arith.constant 0 : i32
    %c0_i32_0 = arith.constant 0 : i32
    %c0_i32_1 = arith.constant 0 : i32
    return %arg0, %c0_i32, %c0_i32_0 : i32, i32, i32
  }
}

</mosaic_0001>

<llo_original>
// kernel: tpu_custom_call.1
$region0: #{tpu_custom_call.1}
  #allocation0 [shape = 'u32[]', space=smem, size = 0x4, offset = 0x4, fixed_abs, tag = 'smem constant byte address 0x4 - core index']
  #allocation1 [shape = 'u32[144,128]{1,0:T(1,128)}', space=vmem, size = 0x12000, scoped, tag = 'internal scratch']
  #allocation2 [shape = 'f32[16,2]{1,0:T(8,128)}', space=vmem, size = 0x2000, scoped, tag = 'scratch operand']
  #allocation3 [shape = 'f32[1,358]{1,0:T(1,128)}', space=vmem, size = 0x600, scoped, tag = 'scratch operand']
  #allocation4 [shape = 'f32[1,358]{1,0:T(1,128)}', space=vmem, size = 0x600, scoped, tag = 'scratch operand']
  #allocation5 [shape = 'f32[1,1]{1,0:T(1,128)S(6)}', space=smem, size = 0x200, scoped, tag = 'scoped memory for tpu_custom_call.1']
  %s0 = inlined_call_operand.hbm [shape: f32[2,16,256], index: 0, kind: input, shape index: {}]
  %s1 = inlined_call_operand.vmem [shape: f32[7,256], index: 1, kind: input, shape index: {}]
  %s2 = inlined_call_operand.vmem [shape: f32[2,16], index: 2, kind: input, shape index: {}]
  %s3 = inlined_call_operand.vmem [shape: f32[2,1], index: 3, kind: input, shape index: {}]
  %s4 = inlined_call_operand.vmem [shape: f32[16,2], index: 4, kind: input, shape index: {}]
  %s5 = inlined_call_operand.vmem [shape: f32[16,1], index: 5, kind: input, shape index: {}]
  %s6 = inlined_call_operand.vmem [shape: f32[2,49], index: 6, kind: input, shape index: {}]
  %s7 = inlined_call_operand.<no memory space> [shape: f32[1,1], index: 7, kind: input, shape index: {}]
  %s8 = inlined_call_operand.hbm [shape: f32[2,16,256], index: 8, kind: output, shape index: {}]
  %s9 = sld [smem:[#allocation0]]
  $region73: #{tpu_custom_call.1} parent=0
    _
  %s11 = ssub.s32 1, %s9
  %s12 = scalar_select 0, %s11, %s9
  %13 = sst [smem:[#allocation5]] %s7
  $region1: #{tpu_custom_call.1} parent=0
    #allocation6 [shape = 'u8[32768]{0}', space=vmem, size = 0x8000, scoped, tag = 'input window, operand 0']
    #allocation7 [shape = 's32[2]{0}', space=sflag, size = 0x8, scoped, tag = 'scoped memory for tpu_custom_call.1']
    #allocation8 [shape = 's32[2]{0}', space=sflag, size = 0x8, scoped, tag = 'scoped memory for tpu_custom_call.1']
    #allocation9 [shape = 's32[2]{0}', space=sflag, size = 0x8, scoped, tag = 'scoped memory for tpu_custom_call.1']
    #allocation10 [shape = 'u8[1024]{0}', space=smem, size = 0x400, scoped, tag = 'input window, operand 6, single buffered']
    #allocation11 [shape = 'u8[32768]{0}', space=vmem, size = 0x8000, scoped, tag = 'output window, operand 0']
    %14 = vsyncpa [#allocation7], 0
    %s15 = scalar_lea.sflag [#allocation7], 1
    %16 = vsyncpa %s15, 0
    %17 = vsyncpa [#allocation9], 0
    %18 = vsyncpa [#allocation8], 0
    %s19 = scalar_lea.sflag [#allocation8], 1
    %20 = vsyncpa %s19, 0
    loop: start=0, step=1, limit=4
    $region2: #{tpu_custom_call.1} parent=1 // loop_pre_header
      _
    $region3: #{tpu_custom_call.1} parent=1 // loop_header
      %s22 = sphi 0, %s26
      %p23 = scmp.ge.s32.totalorder %s22, 4
      %s32 = sphi 0, %s34
      %s35 = sphi 0, %s32
      %s36 = sphi 0, %s35
      %s52 = sphi 0, %s36
      %s56 = sphi 0, %s56
      %s58 = sphi 0, %s56
      %s59 = sphi 0, %s58
      %s73 = sphi 0, %s59
      %s77 = sphi 0, %s77
      %s79 = sphi 0, %s77
      %s80 = sphi 0, %s79
      %s94 = sphi 0, %s80
      %s98 = sphi 0, %s98
      %s100 = sphi 0, %s98
      %s101 = sphi 0, %s100
      %s115 = sphi 0, %s101
      %s119 = sphi 0, %s119
      %s121 = sphi 0, %s119
      %s122 = sphi 0, %s121
      %s136 = sphi 0, %s122
      %s140 = sphi 0, %s140
      %s142 = sphi 0, %s140
      %s143 = sphi 0, %s142
      %s157 = sphi 0, %s143
      %s161 = sphi 0, %s161
      %s163 = sphi 0, %s161
      %s164 = sphi 0, %s163
      %s178 = sphi 0, %s164
      %s182 = sphi 0, %s182
      %s184 = sphi 0, %s182
      %s185 = sphi 0, %s184
      %s199 = sphi 0, %s185
      %s205 = sphi 0, %s207
      %s208 = sphi 0, %s205
      %s209 = sphi 0, %s208
      %s225 = sphi 0, %s209
    $region4: #{tpu_custom_call.1} parent=1 // loop_header_branch
      %25 = sbr.rel (%p23) target = $region8
    $region5: #{tpu_custom_call.1} parent=1 // loop_body
      %s27 = ssub.s32 %s22, 1
      %s28 = ssub.s32 %s22, 2
      %s29 = sadd.s32 %s22, 1
      %s30 = ssub.s32 %s22, %s29
      %p31 = scmp.eq.s32.totalorder %s30, 0
      %s33 = sadd.s32 %s32, 1
      %s34 = scalar_select %p31, %s32, %s33
      %p37 = pneg %p31
      %p38 = scmp.eq.s32.totalorder %s22, 1
      %p39 = por %p37, %p38
      %p40 = scmp.ne.s32.totalorder %s32, %s35
      %p41 = scmp.eq.s32.totalorder %s22, 0
      %p42 = por %p40, %p41
      %p43 = scmp.ne.s32.totalorder %s32, %s35
      %p44 = scmp.eq.s32.totalorder %s27, 1
      %p45 = por %p43, %p44
      %p46 = scmp.ne.s32.totalorder %s35, %s36
      %p47 = scmp.eq.s32.totalorder %s27, 0
      %p48 = por %p46, %p47
      %p49 = scmp.ne.s32.totalorder %s35, %s36
      %p50 = scmp.eq.s32.totalorder %s28, 1
      %p51 = por %p49, %p50
      %p53 = scmp.ne.s32.totalorder %s36, %s52
      %p54 = scmp.eq.s32.totalorder %s28, 0
      %p55 = por %p53, %p54
      %s57 = sadd.s32 %s56, 1
      %p60 = scmp.eq.s32.totalorder %s22, 1
      %p61 = scmp.ne.s32.totalorder %s56, %s58
      %p62 = scmp.eq.s32.totalorder %s22, 0
      %p63 = por %p61, %p62
      %p64 = scmp.ne.s32.totalorder %s56, %s58
      %p65 = scmp.eq.s32.totalorder %s27, 1
      %p66 = por %p64, %p65
      %p67 = scmp.ne.s32.totalorder %s58, %s59
      %p68 = scmp.eq.s32.totalorder %s27, 0
      %p69 = por %p67, %p68
      %p70 = scmp.ne.s32.totalorder %s58, %s59
      %p71 = scmp.eq.s32.totalorder %s28, 1
      %p72 = por %p70, %p71
      %p74 = scmp.ne.s32.totalorder %s59, %s73
      %p75 = scmp.eq.s32.totalorder %s28, 0
      %p76 = por %p74, %p75
      %s78 = sadd.s32 %s77, 1
      %p81 = scmp.eq.s32.totalorder %s22, 1
      %p82 = scmp.ne.s32.totalorder %s77, %s79
      %p83 = scmp.eq.s32.totalorder %s22, 0
      %p84 = por %p82, %p83
      %p85 = scmp.ne.s32.totalorder %s77, %s79
      %p86 = scmp.eq.s32.totalorder %s27, 1
      %p87 = por %p85, %p86
      %p88 = scmp.ne.s32.totalorder %s79, %s80
      %p89 = scmp.eq.s32.totalorder %s27, 0
      %p90 = por %p88, %p89
      %p91 = scmp.ne.s32.totalorder %s79, %s80
      %p92 = scmp.eq.s32.totalorder %s28, 1
      %p93 = por %p91, %p92
      %p95 = scmp.ne.s32.totalorder %s80, %s94
      %p96 = scmp.eq.s32.totalorder %s28, 0
      %p97 = por %p95, %p96
      %s99 = sadd.s32 %s98, 1
      %p102 = scmp.eq.s32.totalorder %s22, 1
      %p103 = scmp.ne.s32.totalorder %s98, %s100
      %p104 = scmp.eq.s32.totalorder %s22, 0
      %p105 = por %p103, %p104
      %p106 = scmp.ne.s32.totalorder %s98, %s100
      %p107 = scmp.eq.s32.totalorder %s27, 1
      %p108 = por %p106, %p107
      %p109 = scmp.ne.s32.totalorder %s100, %s101
      %p110 = scmp.eq.s32.totalorder %s27, 0
      %p111 = por %p109, %p110
      %p112 = scmp.ne.s32.totalorder %s100, %s101
      %p113 = scmp.eq.s32.totalorder %s28, 1
      %p114 = por %p112, %p113
      %p116 = scmp.ne.s32.totalorder %s101, %s115
      %p117 = scmp.eq.s32.totalorder %s28, 0
      %p118 = por %p116, %p117
      %s120 = sadd.s32 %s119, 1
      %p123 = scmp.eq.s32.totalorder %s22, 1
      %p124 = scmp.ne.s32.totalorder %s119, %s121
      %p125 = scmp.eq.s32.totalorder %s22, 0
      %p126 = por %p124, %p125
      %p127 = scmp.ne.s32.totalorder %s119, %s121
      %p128 = scmp.eq.s32.totalorder %s27, 1
      %p129 = por %p127, %p128
      %p130 = scmp.ne.s32.totalorder %s121, %s122
      %p131 = scmp.eq.s32.totalorder %s27, 0
      %p132 = por %p130, %p131
      %p133 = scmp.ne.s32.totalorder %s121, %s122
      %p134 = scmp.eq.s32.totalorder %s28, 1
      %p135 = por %p133, %p134
      %p137 = scmp.ne.s32.totalorder %s122, %s136
      %p138 = scmp.eq.s32.totalorder %s28, 0
      %p139 = por %p137, %p138
      %s141 = sadd.s32 %s140, 1
      %p144 = scmp.eq.s32.totalorder %s22, 1
      %p145 = scmp.ne.s32.totalorder %s140, %s142
      %p146 = scmp.eq.s32.totalorder %s22, 0
      %p147 = por %p145, %p146
      %p148 = scmp.ne.s32.totalorder %s140, %s142
      %p149 = scmp.eq.s32.totalorder %s27, 1
      %p150 = por %p148, %p149
      %p151 = scmp.ne.s32.totalorder %s142, %s143
      %p152 = scmp.eq.s32.totalorder %s27, 0
      %p153 = por %p151, %p152
      %p154 = scmp.ne.s32.totalorder %s142, %s143
      %p155 = scmp.eq.s32.totalorder %s28, 1
      %p156 = por %p154, %p155
      %p158 = scmp.ne.s32.totalorder %s143, %s157
      %p159 = scmp.eq.s32.totalorder %s28, 0
      %p160 = por %p158, %p159
      %s162 = sadd.s32 %s161, 1
      %p165 = scmp.eq.s32.totalorder %s22, 1
      %p166 = scmp.ne.s32.totalorder %s161, %s163
      %p167 = scmp.eq.s32.totalorder %s22, 0
      %p168 = por %p166, %p167
      %p169 = scmp.ne.s32.totalorder %s161, %s163
      %p170 = scmp.eq.s32.totalorder %s27, 1
      %p171 = por %p169, %p170
      %p172 = scmp.ne.s32.totalorder %s163, %s164
      %p173 = scmp.eq.s32.totalorder %s27, 0
      %p174 = por %p172, %p173
      %p175 = scmp.ne.s32.totalorder %s163, %s164
      %p176 = scmp.eq.s32.totalorder %s28, 1
      %p177 = por %p175, %p176
      %p179 = scmp.ne.s32.totalorder %s164, %s178
      %p180 = scmp.eq.s32.totalorder %s28, 0
      %p181 = por %p179, %p180
      %s183 = sadd.s32 %s182, 1
      %p186 = scmp.eq.s32.totalorder %s22, 1
      %p187 = scmp.ne.s32.totalorder %s182, %s184
      %p188 = scmp.eq.s32.totalorder %s22, 0
      %p189 = por %p187, %p188
      %p190 = scmp.ne.s32.totalorder %s182, %s184
      %p191 = scmp.eq.s32.totalorder %s27, 1
      %p192 = por %p190, %p191
      %p193 = scmp.ne.s32.totalorder %s184, %s185
      %p194 = scmp.eq.s32.totalorder %s27, 0
      %p195 = por %p193, %p194
      %p196 = scmp.ne.s32.totalorder %s184, %s185
      %p197 = scmp.eq.s32.totalorder %s28, 1
      %p198 = por %p196, %p197
      %p200 = scmp.ne.s32.totalorder %s185, %s199
      %p201 = scmp.eq.s32.totalorder %s28, 0
      %p202 = por %p200, %p201
      %s203 = ssub.s32 %s22, %s29
      %p204 = scmp.eq.s32.totalorder %s203, 0
      %s206 = sadd.s32 %s205, 1
      %s207 = scalar_select %p204, %s205, %s206
      %p210 = pneg %p204
      %p211 = scmp.eq.s32.totalorder %s22, 1
      %p212 = por %p210, %p211
      %p213 = scmp.ne.s32.totalorder %s205, %s208
      %p214 = scmp.eq.s32.totalorder %s22, 0
      %p215 = por %p213, %p214
      %p216 = scmp.ne.s32.totalorder %s205, %s208
      %p217 = scmp.eq.s32.totalorder %s27, 1
      %p218 = por %p216, %p217
      %p219 = scmp.ne.s32.totalorder %s208, %s209
      %p220 = scmp.eq.s32.totalorder %s27, 0
      %p221 = por %p219, %p220
      %p222 = scmp.ne.s32.totalorder %s208, %s209
      %p223 = scmp.eq.s32.totalorder %s28, 1
      %p224 = por %p222, %p223
      %p226 = scmp.ne.s32.totalorder %s209, %s225
      %p227 = scmp.eq.s32.totalorder %s28, 0
      %p228 = por %p226, %p227
      %p229 = scmp.le.s32.totalorder 1, %s22
      %p230 = scmp.lt.s32.totalorder %s22, 3
      %p231 = pnand %p229, %p230
      %p232 = pneg %p231
      // Predicated region
      $region9: #{tpu_custom_call.1} parent=5 // pred_check
        _
      $region10: #{tpu_custom_call.1} parent=5 // pred_check_branch
        %234 = sbr.rel (%p231) target = $region12
      $region11: #{tpu_custom_call.1} parent=5 // pred_region
        %s235 = ssub.s32 %s22, 1
        // Predicated region
        $region13: #{tpu_custom_call.1} parent=11 // pred_check
          %p236 = pneg %p69
        $region14: #{tpu_custom_call.1} parent=11 // pred_check_branch
          %238 = sbr.rel (%p236) target = $region16
        $region15: #{tpu_custom_call.1} parent=11 // pred_region
          _
        $region16: #{tpu_custom_call.1} parent=11 // pred_fallthru
          _
        // Predicated region
        $region17: #{tpu_custom_call.1} parent=11 // pred_check
          %p239 = pneg %p90
        $region18: #{tpu_custom_call.1} parent=11 // pred_check_branch
          %241 = sbr.rel (%p239) target = $region20
        $region19: #{tpu_custom_call.1} parent=11 // pred_region
          _
        $region20: #{tpu_custom_call.1} parent=11 // pred_fallthru
          _
        // Predicated region
        $region21: #{tpu_custom_call.1} parent=11 // pred_check
          %p242 = pneg %p111
        $region22: #{tpu_custom_call.1} parent=11 // pred_check_branch
          %244 = sbr.rel (%p242) target = $region24
        $region23: #{tpu_custom_call.1} parent=11 // pred_region
          _
        $region24: #{tpu_custom_call.1} parent=11 // pred_fallthru
          _
        // Predicated region
        $region25: #{tpu_custom_call.1} parent=11 // pred_check
          %p245 = pneg %p132
        $region26: #{tpu_custom_call.1} parent=11 // pred_check_branch
          %247 = sbr.rel (%p245) target = $region28
        $region27: #{tpu_custom_call.1} parent=11 // pred_region
          _
        $region28: #{tpu_custom_call.1} parent=11 // pred_fallthru
          _
        // Predicated region
        $region29: #{tpu_custom_call.1} parent=11 // pred_check
          %p248 = pneg %p153
        $region30: #{tpu_custom_call.1} parent=11 // pred_check_branch
          %250 = sbr.rel (%p248) target = $region32
        $region31: #{tpu_custom_call.1} parent=11 // pred_region
          _
        $region32: #{tpu_custom_call.1} parent=11 // pred_fallthru
          _
        // Predicated region
        $region33: #{tpu_custom_call.1} parent=11 // pred_check
          %p251 = pneg %p174
        $region34: #{tpu_custom_call.1} parent=11 // pred_check_branch
          %253 = sbr.rel (%p251) target = $region36
        $region35: #{tpu_custom_call.1} parent=11 // pred_region
          %s255 = ssub.s32 32, 32
          %256 = vsyncadd [#allocation9], %s255
          %s258 = sshll.u32 %s6, 4
          %s259 = int_to_ptr.vmem [resolvable:$true] %s258
          %261 = dma.vmem_to_smem %s259, 32, [#allocation10], [#allocation9]
        $region36: #{tpu_custom_call.1} parent=11 // pred_fallthru
          _
        // Predicated region
        $region37: #{tpu_custom_call.1} parent=11 // pred_check
          %p262 = pneg %p195
        $region38: #{tpu_custom_call.1} parent=11 // pred_check_branch
          %264 = sbr.rel (%p262) target = $region40
        $region39: #{tpu_custom_call.1} parent=11 // pred_region
          _
        $region40: #{tpu_custom_call.1} parent=11 // pred_fallthru
          _
      $region12: #{tpu_custom_call.1} parent=5 // pred_fallthru
        _
      %p265 = scmp.lt.s32.totalorder %s22, 2
      // Predicated region
      $region41: #{tpu_custom_call.1} parent=5 // pred_check
        %p266 = pneg %p265
      $region42: #{tpu_custom_call.1} parent=5 // pred_check_branch
        %268 = sbr.rel (%p266) target = $region44
      $region43: #{tpu_custom_call.1} parent=5 // pred_region
        // Predicated region
        $region45: #{tpu_custom_call.1} parent=43 // pred_check
          %p269 = pneg %p42
        $region46: #{tpu_custom_call.1} parent=43 // pred_check_branch
          %271 = sbr.rel (%p269) target = $region48
        $region47: #{tpu_custom_call.1} parent=43 // pred_region
          %s272 = sand.u32 %s32, 1
          %s273 = scalar_lea.sflag [#allocation7], %s272
          %s274 = sand.u32 %s32, 1
          %s275 = smul.addr %s274, 32
          %s276 = scalar_lea.vmem [#allocation6], %s275
          %s278 = ssub.s32 512, 512
          %279 = vsyncadd %s273, %s278
          %s280 = smul.addr %s22, 4
          %s281 = smul.addr %s280, 128
          %s282 = scalar_lea.hbm %s0, %s281
          %s283 = sshll.u32 %s276, 4
          %s284 = int_to_ptr.vmem [resolvable:$true] %s283
          %289 = dma.hbm_to_vmem [thread:$0]  %s282, 512, %s284, %s273, 256, 256, 16
        $region48: #{tpu_custom_call.1} parent=43 // pred_fallthru
          _
      $region44: #{tpu_custom_call.1} parent=5 // pred_fallthru
        _
      %p290 = scmp.le.s32.totalorder 1, %s22
      %p291 = scmp.lt.s32.totalorder %s22, 3
      %p292 = pnand %p290, %p291
      %p293 = pneg %p292
      // Predicated region
      $region49: #{tpu_custom_call.1} parent=5 // pred_check
        _
      $region50: #{tpu_custom_call.1} parent=5 // pred_check_branch
        %295 = sbr.rel (%p292) target = $region52
      $region51: #{tpu_custom_call.1} parent=5 // pred_region
        %s296 = ssub.s32 %s22, 1
        %s297 = sand.u32 %s35, 1
        %s298 = scalar_lea.sflag [#allocation7], %s297
        %s299 = sand.u32 %s35, 1
        %s300 = smul.addr %s299, 32
        %s301 = scalar_lea.vmem [#allocation6], %s300
        // Predicated region
        $region53: #{tpu_custom_call.1} parent=51 // pred_check
          %p302 = pneg %p48
        $region54: #{tpu_custom_call.1} parent=51 // pred_check_branch
          %304 = sbr.rel (%p302) target = $region56
        $region55: #{tpu_custom_call.1} parent=51 // pred_region
          %305 = dma.done %s298, 512
        $region56: #{tpu_custom_call.1} parent=51 // pred_fallthru
          _
        // Predicated region
        $region57: #{tpu_custom_call.1} parent=51 // pred_check
          %p306 = pneg %p174
        $region58: #{tpu_custom_call.1} parent=51 // pred_check_branch
          %308 = sbr.rel (%p306) target = $region60
        $region59: #{tpu_custom_call.1} parent=51 // pred_region
          %309 = dma.done [#allocation9], 32
        $region60: #{tpu_custom_call.1} parent=51 // pred_fallthru
          _
        %310 = sfence
        %s311 = sand.u32 %s35, 1
        %s312 = scalar_lea.sflag [#allocation7], %s311
        %s313 = sand.u32 %s35, 1
        %s314 = smul.addr %s313, 32
        %s315 = scalar_lea.vmem [#allocation6], %s314
        %p316 = pneg %p48
        %p317 = pneg %p45
        %p318 = pneg %p69
        %p319 = pneg %p66
        %p320 = pneg %p90
        %p321 = pneg %p87
        %p322 = pneg %p111
        %p323 = pneg %p108
        %p324 = pneg %p132
        %p325 = pneg %p129
        %p326 = pneg %p153
        %p327 = pneg %p150
        %p328 = pneg %p174
        %p329 = pneg %p171
        %p330 = pneg %p195
        %p331 = pneg %p192
        %p332 = pneg %p221
        %p333 = pneg %p218
        %s334 = sand.u32 %s208, 1
        %s335 = scalar_lea.sflag [#allocation8], %s334
        %s336 = sand.u32 %s208, 1
        %s337 = smul.addr %s336, 32
        %s338 = scalar_lea.vmem [#allocation11], %s337
        %v339 = vlaneseq
        %vm340 = vcmp.ge.s32.totalorder %v339, 0
        %vm341 = vcmp.lt.s32.totalorder %v339, 51
        %vm342 = vmand %vm340, %vm341
        %343 = vst.msk [vmem:[#allocation3] sm:$0x1] %vm342, 0.0
        %vm344 = vcmp.ge.s32.totalorder %v339, 51
        %vm345 = vcmp.lt.s32.totalorder %v339, 102
        %vm346 = vmand %vm344, %vm345
        %347 = vst.msk [vmem:[#allocation3 + $0x2] sm:$0x1] %vm346, 0.0
        %348 = vst.msk [vmem:[#allocation4] sm:$0x1] %vm342, 0.0
        %349 = vst.msk [vmem:[#allocation4 + $0x2] sm:$0x1] %vm346, 0.0
        %v350 = vld [vmem:[%s301] sm:$0xff]
        %v351 = vld [vmem:[%s301 + $0x8] sm:$0xff]
        %v352 = vld [vmem:[%s301 + $0x10] sm:$0xff]
        %v353 = vld [vmem:[%s301 + $0x18] sm:$0xff]
        %v354 = vadd.f32 %v350, %v351
        %355 = vadd.xlane.f32.xlu0 %v354
        %v356 = vpop.xlane.xlu0 %355
        %v357 = vadd.f32 %v352, %v353
        %358 = vadd.xlane.f32.xlu0 %v357
        %v359 = vpop.xlane.xlu0 %358
        %v360 = vrcp.pop 256.0
        %v361 = vmul.f32 %v356, %v360
        %v362 = vmul.f32 %v359, %v360
        %vm363 = vcmask 7168
        %364 = vst.msk [vmem:[#allocation2] sm:$0xff] %vm363, %v361
        %365 = vst.msk [vmem:[#allocation2 + $0x8] sm:$0xff] %vm363, %v362
        %v366 = vmax.f32 %v350, %v351
        %367 = vmax.xlane.f32.xlu0 %v366
        %v368 = vpop.xlane.xlu0 %367
        %v369 = vmax.f32 %v352, %v353
        %370 = vmax.xlane.f32.xlu0 %v369
        %v371 = vpop.xlane.xlu0 %370
        %vm372 = vcmask 15368
        %373 = vst.msk [vmem:[#allocation2] sm:$0xff] %vm372, %v368
        %374 = vst.msk [vmem:[#allocation2 + $0x8] sm:$0xff] %vm372, %v371
        %v375 = vadd.f32 %v350, %v352
        %v376 = vrot.slane %v375, 4
        %v377 = vadd.f32 %v375, %v376
        %v378 = vrot.slane %v377, 2
        %v379 = vadd.f32 %v377, %v378
        %v380 = vrot.slane %v379, 1
        %v381 = vadd.f32 %v379, %v380
        %v382 = vadd.f32 %v351, %v353
        %v383 = vrot.slane %v382, 4
        %v384 = vadd.f32 %v382, %v383
        %v385 = vrot.slane %v384, 2
        %v386 = vadd.f32 %v384, %v385
        %v387 = vrot.slane %v386, 1
        %v388 = vadd.f32 %v386, %v387
        %v389 = vrcp.pop 16.0
        %v390 = vmul.f32 %v381, %v389
        %v391 = vmul.f32 %v388, %v389
        %v394 = vcombine.low %v390, %v391
        %v396 = vunpack.c.l.s4 1966171168
        %v397 = vunpack.c.0.s8 %v396
        %v398 = vlaneseq
        %v399 = vshrl.u32 %v398, 7
        %v400 = vsub.s32 %v397, %v399
        %v401 = vrot.slane %v394, %v400
        %v403 = vunpack.c.l.s4 1966171168
        %v404 = vunpack.c.0.s8 %v403
        %v405 = vlaneseq
        %v406 = vshrl.u32 %v405, 7
        %v407 = vsub.s32 %v404, %v406
        %v408 = vrot.slane %v401, %v407
        %409 = vrot.lane.b32.xlu0 %v408, 51
        %v410 = vpop.permute.xlu0 %409
        %v411 = vrot.slane %v410, 7
        %vm412 = vcmask 416768
        %v413 = vsel %vm412, %v411, %v410
        %vm415 = vcmp.lt.s32.totalorder %v339, 307
        %vm416 = vmand %vm344, %vm415
        %417 = vst.msk [vmem:[#allocation3] sm:$0x7] %vm416, %v413
        %v418 = vmax.f32 %v350, %v352
        %v419 = vrot.slane %v418, 4
        %v420 = vmax.f32 %v418, %v419
        %v421 = vrot.slane %v420, 2
        %v422 = vmax.f32 %v420, %v421
        %v423 = vrot.slane %v422, 1
        %v424 = vmax.f32 %v422, %v423
        %v425 = vmax.f32 %v351, %v353
        %v426 = vrot.slane %v425, 4
        %v427 = vmax.f32 %v425, %v426
        %v428 = vrot.slane %v427, 2
        %v429 = vmax.f32 %v427, %v428
        %v430 = vrot.slane %v429, 1
        %v431 = vmax.f32 %v429, %v430
        %v434 = vcombine.low %v424, %v431
        %v436 = vunpack.c.l.s4 1966171168
        %v437 = vunpack.c.0.s8 %v436
        %v438 = vlaneseq
        %v439 = vshrl.u32 %v438, 7
        %v440 = vsub.s32 %v437, %v439
        %v441 = vrot.slane %v434, %v440
        %v443 = vunpack.c.l.s4 1966171168
        %v444 = vunpack.c.0.s8 %v443
        %v445 = vlaneseq
        %v446 = vshrl.u32 %v445, 7
        %v447 = vsub.s32 %v444, %v446
        %v448 = vrot.slane %v441, %v447
        %449 = vrot.lane.b32.xlu0 %v448, 51
        %v450 = vpop.permute.xlu0 %449
        %v451 = vrot.slane %v450, 7
        %v452 = vsel %vm412, %v451, %v450
        %454 = vst.msk [vmem:[#allocation4] sm:$0x7] %vm416, %v452
        %v455 = vld [vmem:[#allocation2] sm:$0xff]
        %v456 = vld [vmem:[#allocation2 + $0x8] sm:$0xff]
        %v457 = vld [vmem:[%s2] sm:$0x3]
        %v458 = vld [vmem:[%s3] sm:$0x3]
        %460 = vset.pattern.permute.xlu0 0
        %461 = vperm.xlu0 %460, %v458
        %v462 = vpop.permute.xlu0 %461
        %vm464 = vcmask 130048
        %v466 = vsel %vm464, %v457, 0
        %468 = vmatprep.subr.mxu0 0.0
        %469 = vmatpush1.msra.mxu0 %v455
        %470 = vmatprep.subr.mxu0 0.0
        %471 = vmatpush1.msra.mxu0 %v456
        %472 = vmatprep.subr.mxu0 0.0
        %473 = vmatpush1.msra.mxu0 0.0
        %474 = vmatprep.subr.mxu0 0.0
        %475 = vmatpush1.msra.mxu0 0.0
        %476 = vmatprep.subr.mxu0 0.0
        %477 = vmatpush1.msra.mxu0 0.0
        %478 = vmatprep.subr.mxu0 0.0
        %479 = vmatpush1.msra.mxu0 0.0
        %480 = vmatprep.subr.mxu0 0.0
        %481 = vmatpush1.msra.mxu0 0.0
        %482 = vmatprep.subr.mxu0 0.0
        %483 = vmatpush1.msra.mxu0 0.0
        %484 = vmatprep.subr.mxu0 0.0
        %485 = vmatpush1.msra.mxu0 0.0
        %486 = vmatprep.subr.mxu0 0.0
        %487 = vmatpush1.msra.mxu0 0.0
        %488 = vmatprep.subr.mxu0 0.0
        %489 = vmatpush1.msra.mxu0 0.0
        %490 = vmatprep.subr.mxu0 0.0
        %491 = vmatpush1.msra.mxu0 0.0
        %492 = vmatprep.subr.mxu0 0.0
        %493 = vmatpush1.msra.mxu0 0.0
        %494 = vmatprep.subr.mxu0 0.0
        %495 = vmatpush1.msra.mxu0 0.0
        %496 = vmatprep.subr.mxu0 0.0
        %497 = vmatpush1.msra.mxu0 0.0
        %498 = vmatprep.subr.mxu0 0.0
        %499 = vmatpush1.msra.mxu0 0.0
        %500 = vmatprep.subr.mxu0 0.0
        %501 = vmatpush1.msra.mxu0 0.0
        %502 = vmatprep.subr.mxu0 0.0
        %503 = vmatpush1.msra.mxu0 0.0
        %504 = vmatprep.subr.mxu0 0.0
        %505 = vmatpush1.msra.mxu0 0.0
        %506 = vmatprep.subr.mxu0 0.0
        %507 = vmatpush1.msra.mxu0 0.0
        %508 = vmatprep.subr.mxu0 0.0
        %509 = vmatpush1.msra.mxu0 0.0
        %510 = vmatprep.subr.mxu0 0.0
        %511 = vmatpush1.msra.mxu0 0.0
        %512 = vmatprep.subr.mxu0 0.0
        %513 = vmatpush1.msra.mxu0 0.0
        %514 = vmatprep.subr.mxu0 0.0
        %515 = vmatpush1.msra.mxu0 0.0
        %516 = vmatprep.subr.mxu0 0.0
        %517 = vmatpush1.msra.mxu0 0.0
        %518 = vmatprep.subr.mxu0 0.0
        %519 = vmatpush1.msra.mxu0 0.0
        %520 = vmatprep.subr.mxu0 0.0
        %521 = vmatpush1.msra.mxu0 0.0
        %522 = vmatprep.subr.mxu0 0.0
        %523 = vmatpush1.msra.mxu0 0.0
        %524 = vmatprep.subr.mxu0 0.0
        %525 = vmatpush1.msra.mxu0 0.0
        %526 = vmatprep.subr.mxu0 0.0
        %527 = vmatpush1.msra.mxu0 0.0
        %528 = vmatprep.subr.mxu0 0.0
        %529 = vmatpush1.msra.mxu0 0.0
        %530 = vmatprep.subr.mxu0 0.0
        %531 = vmatpush1.msra.mxu0 0.0
        %532 = vmatprep.mubr.f32.mxu0 0.0
        %533 = vmatmul.mubr.f32.gmra.mrb[0].mxu0 %v466
        %v534 = vpop.f32.mrb[0].mxu0
        %v535 = vadd.f32 %v462, %v534
        %v536 = vpop.f32.mrb[0].mxu0
        %537 = vdwg.mxu0
        %v538 = vmax.f32 %v535, 0.0
        %v539 = vld [vmem:[%s4] sm:$0xff]
        %v540 = vld [vmem:[%s4 + $0x8] sm:$0xff]
        %v541 = vld [vmem:[%s5] sm:$0xff]
        %v542 = vld [vmem:[%s5 + $0x8] sm:$0xff]
        %544 = vset.pattern.permute.xlu0 0
        %545 = vperm.xlu0 %544, %v541
        %v546 = vpop.permute.xlu0 %545
        %549 = vset.pattern.permute.xlu0 0
        %550 = vperm.xlu0 %549, %v542
        %v551 = vpop.permute.xlu0 %550
        %vm553 = vcmask 15360
        %v555 = vsel %vm553, %v539, 0
        %v558 = vsel %vm553, %v540, 0
        %vm560 = vcmask 1041408
        %v562 = vsel %vm560, %v538, 0
        %564 = vmatprep.subr.mxu0 0.0
        %565 = vmatpush1.msra.mxu0 %v562
        %566 = vmatprep.subr.mxu0 0.0
        %567 = vmatpush1.msra.mxu0 0.0
        %568 = vmatprep.subr.mxu0 0.0
        %569 = vmatpush1.msra.mxu0 0.0
        %570 = vmatprep.subr.mxu0 0.0
        %571 = vmatpush1.msra.mxu0 0.0
        %572 = vmatprep.subr.mxu0 0.0
        %573 = vmatpush1.msra.mxu0 0.0
        %574 = vmatprep.subr.mxu0 0.0
        %575 = vmatpush1.msra.mxu0 0.0
        %576 = vmatprep.subr.mxu0 0.0
        %577 = vmatpush1.msra.mxu0 0.0
        %578 = vmatprep.subr.mxu0 0.0
        %579 = vmatpush1.msra.mxu0 0.0
        %580 = vmatprep.subr.mxu0 0.0
        %581 = vmatpush1.msra.mxu0 0.0
        %582 = vmatprep.subr.mxu0 0.0
        %583 = vmatpush1.msra.mxu0 0.0
        %584 = vmatprep.subr.mxu0 0.0
        %585 = vmatpush1.msra.mxu0 0.0
        %586 = vmatprep.subr.mxu0 0.0
        %587 = vmatpush1.msra.mxu0 0.0
        %588 = vmatprep.subr.mxu0 0.0
        %589 = vmatpush1.msra.mxu0 0.0
        %590 = vmatprep.subr.mxu0 0.0
        %591 = vmatpush1.msra.mxu0 0.0
        %592 = vmatprep.subr.mxu0 0.0
        %593 = vmatpush1.msra.mxu0 0.0
        %594 = vmatprep.subr.mxu0 0.0
        %595 = vmatpush1.msra.mxu0 0.0
        %596 = vmatprep.subr.mxu0 0.0
        %597 = vmatpush1.msra.mxu0 0.0
        %598 = vmatprep.subr.mxu0 0.0
        %599 = vmatpush1.msra.mxu0 0.0
        %600 = vmatprep.subr.mxu0 0.0
        %601 = vmatpush1.msra.mxu0 0.0
        %602 = vmatprep.subr.mxu0 0.0
        %603 = vmatpush1.msra.mxu0 0.0
        %604 = vmatprep.subr.mxu0 0.0
        %605 = vmatpush1.msra.mxu0 0.0
        %606 = vmatprep.subr.mxu0 0.0
        %607 = vmatpush1.msra.mxu0 0.0
        %608 = vmatprep.subr.mxu0 0.0
        %609 = vmatpush1.msra.mxu0 0.0
        %610 = vmatprep.subr.mxu0 0.0
        %611 = vmatpush1.msra.mxu0 0.0
        %612 = vmatprep.subr.mxu0 0.0
        %613 = vmatpush1.msra.mxu0 0.0
        %614 = vmatprep.subr.mxu0 0.0
        %615 = vmatpush1.msra.mxu0 0.0
        %616 = vmatprep.subr.mxu0 0.0
        %617 = vmatpush1.msra.mxu0 0.0
        %618 = vmatprep.subr.mxu0 0.0
        %619 = vmatpush1.msra.mxu0 0.0
        %620 = vmatprep.subr.mxu0 0.0
        %621 = vmatpush1.msra.mxu0 0.0
        %622 = vmatprep.subr.mxu0 0.0
        %623 = vmatpush1.msra.mxu0 0.0
        %624 = vmatprep.subr.mxu0 0.0
        %625 = vmatpush1.msra.mxu0 0.0
        %626 = vmatprep.subr.mxu0 0.0
        %627 = vmatpush1.msra.mxu0 0.0
        %628 = vmatprep.mubr.f32.mxu0 0.0
        %629 = vmatmul.mubr.f32.gmra.mrb[0].mxu0 %v555
        %v630 = vpop.f32.mrb[0].mxu0
        %v631 = vadd.f32 %v546, %v630
        %v632 = vpop.f32.mrb[0].mxu0
        %633 = vmatprep.mubr.f32.mxu0 0.0
        %634 = vmatmul.mubr.f32.gmra.mrb[0].mxu0 %v558
        %v635 = vpop.f32.mrb[0].mxu0
        %v636 = vadd.f32 %v551, %v635
        %v637 = vpop.f32.mrb[0].mxu0
        %638 = vdwg.mxu0
        %641 = vrot.lane.b32.xlu0 %v631, 127
        %v642 = vpop.permute.xlu0 %641
        %643 = vrot.lane.b32.xlu0 %v636, 127
        %v644 = vpop.permute.xlu0 %643
        %v647 = vadd.f32 %v631, %v642
        %v648 = vadd.f32 %v636, %v644
        %v649 = vmul.f32 %v647, 0.5
        %v650 = vmul.f32 %v648, 0.5
        %v651 = vtanh.pop %v649
        %v652 = vtanh.pop %v650
        %v653 = vadd.f32 %v651, 1.0
        %v654 = vadd.f32 %v652, 1.0
        %v655 = vmul.f32 %v653, 0.5
        %v656 = vmul.f32 %v654, 0.5
        %v657 = vld [vmem:[%s1] ss:$8 sm:$0x3]
        %s658 = scalar_lea.vmem %s1, 1
        %v659 = vld [vmem:[%s658] ss:$8 sm:$0x3]
        %s660 = scalar_lea.vmem %s1, 2
        %v661 = vld [vmem:[%s660] ss:$8 sm:$0x3]
        %s662 = scalar_lea.vmem %s1, 3
        %v663 = vld [vmem:[%s662] ss:$8 sm:$0x3]
        %s664 = scalar_lea.vmem %s1, 4
        %v665 = vld [vmem:[%s664] ss:$8 sm:$0x3]
        %s666 = scalar_lea.vmem %s1, 5
        %v667 = vld [vmem:[%s666] ss:$8 sm:$0x3]
        %s668 = scalar_lea.vmem %s1, 6
        %v669 = vld [vmem:[%s668] ss:$8 sm:$0x3]
        %s670 = sld [smem:[#allocation5]]
        %v671 = vstv %s670
        %v672 = vadd.f32 %v671, 0.0
        %s673 = sld [smem:[#allocation10]]
        %v674 = vld [vmem:[#allocation3] sm:$0x3]
        %v675 = vstv %s673
        %v676 = vmul.f32 %v675, %v674
        %s677 = sld [smem:[#allocation10 + $0x80]]
        %v678 = vld [vmem:[#allocation4] sm:$0x3]
        %v679 = vstv %s677
        %v680 = vmul.f32 %v679, %v678
        %v681 = vadd.f32 %v676, %v680
        %v682 = vmul.f32 %v681, %v657
        %v683 = vadd.f32 %v672, %v682
        %s684 = sld [smem:[#allocation10 + $0x1]]
        %v685 = vld [vmem:[#allocation3] sm:$0x7]
        %v686 = vstv %s684
        %v687 = vmul.f32 %v686, %v685
        %s688 = sld [smem:[#allocation10 + $0x81]]
        %v689 = vld [vmem:[#allocation4] sm:$0x7]
        %v690 = vstv %s688
        %v691 = vmul.f32 %v690, %v689
        %v692 = vadd.f32 %v687, %v691
        %694 = vrot.lane.b32.xlu0 %v659, 1
        %v695 = vpop.permute.xlu0 %694
        %v696 = vrot.slane %v695, 7
        %v697 = vsel %vm363, %v696, %v695
        %v699 = vmul.f32 %v692, %v697
        %701 = vrot.lane.b32.xlu0 %v699, 127
        %v702 = vpop.permute.xlu0 %701
        %v703 = vrot.slane %v702, 1
        %vm704 = vcmask 1039360
        %v705 = vsel %vm704, %v702, %v703
        %v707 = vadd.f32 %v683, %v705
        %s708 = sld [smem:[#allocation10 + $0x2]]
        %v709 = vstv %s708
        %v710 = vmul.f32 %v709, %v685
        %s711 = sld [smem:[#allocation10 + $0x82]]
        %v712 = vstv %s711
        %v713 = vmul.f32 %v712, %v689
        %v714 = vadd.f32 %v710, %v713
        %716 = vrot.lane.b32.xlu0 %v661, 2
        %v717 = vpop.permute.xlu0 %716
        %v718 = vrot.slane %v717, 7
        %v719 = vsel %vm553, %v718, %v717
        %v721 = vmul.f32 %v714, %v719
        %723 = vrot.lane.b32.xlu0 %v721, 126
        %v724 = vpop.permute.xlu0 %723
        %v725 = vrot.slane %v724, 1
        %vm726 = vcmask 1031168
        %v727 = vsel %vm726, %v724, %v725
        %v729 = vadd.f32 %v707, %v727
        %s730 = sld [smem:[#allocation10 + $0x3]]
        %v731 = vstv %s730
        %v732 = vmul.f32 %v731, %v685
        %s733 = sld [smem:[#allocation10 + $0x83]]
        %v734 = vstv %s733
        %v735 = vmul.f32 %v734, %v689
        %v736 = vadd.f32 %v732, %v735
        %738 = vrot.lane.b32.xlu0 %v663, 3
        %v739 = vpop.permute.xlu0 %738
        %v740 = vrot.slane %v739, 7
        %vm741 = vcmask 23552
        %v742 = vsel %vm741, %v740, %v739
        %v744 = vmul.f32 %v736, %v742
        %746 = vrot.lane.b32.xlu0 %v744, 125
        %v747 = vpop.permute.xlu0 %746
        %v748 = vrot.slane %v747, 1
        %vm749 = vcmask 1022976
        %v750 = vsel %vm749, %v747, %v748
        %v752 = vadd.f32 %v729, %v750
        %s753 = sld [smem:[#allocation10 + $0x4]]
        %v754 = vstv %s753
        %v755 = vmul.f32 %v754, %v685
        %s756 = sld [smem:[#allocation10 + $0x84]]
        %v757 = vstv %s756
        %v758 = vmul.f32 %v757, %v689
        %v759 = vadd.f32 %v755, %v758
        %761 = vrot.lane.b32.xlu0 %v665, 4
        %v762 = vpop.permute.xlu0 %761
        %v763 = vrot.slane %v762, 7
        %vm764 = vcmask 31744
        %v765 = vsel %vm764, %v763, %v762
        %v767 = vmul.f32 %v759, %v765
        %769 = vrot.lane.b32.xlu0 %v767, 124
        %v770 = vpop.permute.xlu0 %769
        %v771 = vrot.slane %v770, 1
        %vm772 = vcmask 1014784
        %v773 = vsel %vm772, %v770, %v771
        %v775 = vadd.f32 %v752, %v773
        %s776 = sld [smem:[#allocation10 + $0x5]]
        %v777 = vstv %s776
        %v778 = vmul.f32 %v777, %v685
        %s779 = sld [smem:[#allocation10 + $0x85]]
        %v780 = vstv %s779
        %v781 = vmul.f32 %v780, %v689
        %v782 = vadd.f32 %v778, %v781
        %784 = vrot.lane.b32.xlu0 %v667, 5
        %v785 = vpop.permute.xlu0 %784
        %v786 = vrot.slane %v785, 7
        %vm787 = vcmask 39936
        %v788 = vsel %vm787, %v786, %v785
        %v790 = vmul.f32 %v782, %v788
        %792 = vrot.lane.b32.xlu0 %v790, 123
        %v793 = vpop.permute.xlu0 %792
        %v794 = vrot.slane %v793, 1
        %vm795 = vcmask 1006592
        %v796 = vsel %vm795, %v793, %v794
        %v798 = vadd.f32 %v775, %v796
        %s799 = sld [smem:[#allocation10 + $0x6]]
        %v800 = vstv %s799
        %v801 = vmul.f32 %v800, %v685
        %s802 = sld [smem:[#allocation10 + $0x86]]
        %v803 = vstv %s802
        %v804 = vmul.f32 %v803, %v689
        %v805 = vadd.f32 %v801, %v804
        %807 = vrot.lane.b32.xlu0 %v669, 6
        %v808 = vpop.permute.xlu0 %807
        %v809 = vrot.slane %v808, 7
        %vm810 = vcmask 48128
        %v811 = vsel %vm810, %v809, %v808
        %v813 = vmul.f32 %v805, %v811
        %815 = vrot.lane.b32.xlu0 %v813, 122
        %v816 = vpop.permute.xlu0 %815
        %v817 = vrot.slane %v816, 1
        %vm818 = vcmask 998400
        %v819 = vsel %vm818, %v816, %v817
        %v821 = vadd.f32 %v798, %v819
        %s822 = sld [smem:[#allocation10 + $0x7]]
        %v823 = vstv %s822
        %v824 = vmul.f32 %v823, %v685
        %s825 = sld [smem:[#allocation10 + $0x87]]
        %v826 = vstv %s825
        %v827 = vmul.f32 %v826, %v689
        %v828 = vadd.f32 %v824, %v827
        %830 = vrot.lane.b32.xlu0 %v657, 16
        %v831 = vpop.permute.xlu0 %830
        %v832 = vrot.slane %v831, 7
        %v833 = vsel %vm464, %v832, %v831
        %v835 = vmul.f32 %v828, %v833
        %837 = vrot.lane.b32.xlu0 %v835, 112
        %v838 = vpop.permute.xlu0 %837
        %v839 = vrot.slane %v838, 1
        %vm840 = vcmask 916480
        %v841 = vsel %vm840, %v838, %v839
        %v843 = vadd.f32 %v821, %v841
        %s844 = sld [smem:[#allocation10 + $0x8]]
        %v845 = vstv %s844
        %v846 = vmul.f32 %v845, %v685
        %s847 = sld [smem:[#allocation10 + $0x88]]
        %v848 = vstv %s847
        %v849 = vmul.f32 %v848, %v689
        %v850 = vadd.f32 %v846, %v849
        %851 = vrot.lane.b32.xlu0 %v659, 17
        %v852 = vpop.permute.xlu0 %851
        %v853 = vrot.slane %v852, 7
        %vm854 = vcmask 138240
        %v855 = vsel %vm854, %v853, %v852
        %v857 = vmul.f32 %v850, %v855
        %859 = vrot.lane.b32.xlu0 %v857, 111
        %v860 = vpop.permute.xlu0 %859
        %v861 = vrot.slane %v860, 1
        %vm862 = vcmask 908288
        %v863 = vsel %vm862, %v860, %v861
        %v865 = vadd.f32 %v843, %v863
        %s866 = sld [smem:[#allocation10 + $0x9]]
        %v867 = vstv %s866
        %v868 = vmul.f32 %v867, %v685
        %s869 = sld [smem:[#allocation10 + $0x89]]
        %v870 = vstv %s869
        %v871 = vmul.f32 %v870, %v689
        %v872 = vadd.f32 %v868, %v871
        %873 = vrot.lane.b32.xlu0 %v661, 18
        %v874 = vpop.permute.xlu0 %873
        %v875 = vrot.slane %v874, 7
        %vm876 = vcmask 146432
        %v877 = vsel %vm876, %v875, %v874
        %v879 = vmul.f32 %v872, %v877
        %881 = vrot.lane.b32.xlu0 %v879, 110
        %v882 = vpop.permute.xlu0 %881
        %v883 = vrot.slane %v882, 1
        %vm884 = vcmask 900096
        %v885 = vsel %vm884, %v882, %v883
        %v887 = vadd.f32 %v865, %v885
        %s888 = sld [smem:[#allocation10 + $0xa]]
        %v889 = vstv %s888
        %v890 = vmul.f32 %v889, %v685
        %s891 = sld [smem:[#allocation10 + $0x8a]]
        %v892 = vstv %s891
        %v893 = vmul.f32 %v892, %v689
        %v894 = vadd.f32 %v890, %v893
        %895 = vrot.lane.b32.xlu0 %v663, 19
        %v896 = vpop.permute.xlu0 %895
        %v897 = vrot.slane %v896, 7
        %vm898 = vcmask 154624
        %v899 = vsel %vm898, %v897, %v896
        %v901 = vmul.f32 %v894, %v899
        %903 = vrot.lane.b32.xlu0 %v901, 109
        %v904 = vpop.permute.xlu0 %903
        %v905 = vrot.slane %v904, 1
        %vm906 = vcmask 891904
        %v907 = vsel %vm906, %v904, %v905
        %v909 = vadd.f32 %v887, %v907
        %s910 = sld [smem:[#allocation10 + $0xb]]
        %v911 = vstv %s910
        %v912 = vmul.f32 %v911, %v685
        %s913 = sld [smem:[#allocation10 + $0x8b]]
        %v914 = vstv %s913
        %v915 = vmul.f32 %v914, %v689
        %v916 = vadd.f32 %v912, %v915
        %917 = vrot.lane.b32.xlu0 %v665, 20
        %v918 = vpop.permute.xlu0 %917
        %v919 = vrot.slane %v918, 7
        %vm920 = vcmask 162816
        %v921 = vsel %vm920, %v919, %v918
        %v923 = vmul.f32 %v916, %v921
        %925 = vrot.lane.b32.xlu0 %v923, 108
        %v926 = vpop.permute.xlu0 %925
        %v927 = vrot.slane %v926, 1
        %vm928 = vcmask 883712
        %v929 = vsel %vm928, %v926, %v927
        %v931 = vadd.f32 %v909, %v929
        %s932 = sld [smem:[#allocation10 + $0xc]]
        %v933 = vstv %s932
        %v934 = vmul.f32 %v933, %v685
        %s935 = sld [smem:[#allocation10 + $0x8c]]
        %v936 = vstv %s935
        %v937 = vmul.f32 %v936, %v689
        %v938 = vadd.f32 %v934, %v937
        %939 = vrot.lane.b32.xlu0 %v667, 21
        %v940 = vpop.permute.xlu0 %939
        %v941 = vrot.slane %v940, 7
        %vm942 = vcmask 171008
        %v943 = vsel %vm942, %v941, %v940
        %v945 = vmul.f32 %v938, %v943
        %947 = vrot.lane.b32.xlu0 %v945, 107
        %v948 = vpop.permute.xlu0 %947
        %v949 = vrot.slane %v948, 1
        %vm950 = vcmask 875520
        %v951 = vsel %vm950, %v948, %v949
        %v953 = vadd.f32 %v931, %v951
        %s954 = sld [smem:[#allocation10 + $0xd]]
        %v955 = vstv %s954
        %v956 = vmul.f32 %v955, %v685
        %s957 = sld [smem:[#allocation10 + $0x8d]]
        %v958 = vstv %s957
        %v959 = vmul.f32 %v958, %v689
        %v960 = vadd.f32 %v956, %v959
        %961 = vrot.lane.b32.xlu0 %v669, 22
        %v962 = vpop.permute.xlu0 %961
        %v963 = vrot.slane %v962, 7
        %vm964 = vcmask 179200
        %v965 = vsel %vm964, %v963, %v962
        %v967 = vmul.f32 %v960, %v965
        %969 = vrot.lane.b32.xlu0 %v967, 106
        %v970 = vpop.permute.xlu0 %969
        %v971 = vrot.slane %v970, 1
        %vm972 = vcmask 867328
        %v973 = vsel %vm972, %v970, %v971
        %v975 = vadd.f32 %v953, %v973
        %s976 = sld [smem:[#allocation10 + $0xe]]
        %v977 = vstv %s976
        %v978 = vmul.f32 %v977, %v685
        %s979 = sld [smem:[#allocation10 + $0x8e]]
        %v980 = vstv %s979
        %v981 = vmul.f32 %v980, %v689
        %v982 = vadd.f32 %v978, %v981
        %983 = vrot.lane.b32.xlu0 %v657, 32
        %v984 = vpop.permute.xlu0 %983
        %v985 = vrot.slane %v984, 7
        %vm986 = vcmask 261120
        %v987 = vsel %vm986, %v985, %v984
        %v989 = vmul.f32 %v982, %v987
        %991 = vrot.lane.b32.xlu0 %v989, 96
        %v992 = vpop.permute.xlu0 %991
        %v993 = vrot.slane %v992, 1
        %vm994 = vcmask 785408
        %v995 = vsel %vm994, %v992, %v993
        %v997 = vadd.f32 %v975, %v995
        %s998 = sld [smem:[#allocation10 + $0xf]]
        %v999 = vstv %s998
        %v1000 = vmul.f32 %v999, %v685
        %s1001 = sld [smem:[#allocation10 + $0x8f]]
        %v1002 = vstv %s1001
        %v1003 = vmul.f32 %v1002, %v689
        %v1004 = vadd.f32 %v1000, %v1003
        %1005 = vrot.lane.b32.xlu0 %v659, 33
        %v1006 = vpop.permute.xlu0 %1005
        %v1007 = vrot.slane %v1006, 7
        %vm1008 = vcmask 269312
        %v1009 = vsel %vm1008, %v1007, %v1006
        %v1011 = vmul.f32 %v1004, %v1009
        %1013 = vrot.lane.b32.xlu0 %v1011, 95
        %v1014 = vpop.permute.xlu0 %1013
        %v1015 = vrot.slane %v1014, 1
        %vm1016 = vcmask 777216
        %v1017 = vsel %vm1016, %v1014, %v1015
        %v1019 = vadd.f32 %v997, %v1017
        %s1020 = sld [smem:[#allocation10 + $0x10]]
        %v1021 = vstv %s1020
        %v1022 = vmul.f32 %v1021, %v685
        %s1023 = sld [smem:[#allocation10 + $0x90]]
        %v1024 = vstv %s1023
        %v1025 = vmul.f32 %v1024, %v689
        %v1026 = vadd.f32 %v1022, %v1025
        %1027 = vrot.lane.b32.xlu0 %v661, 34
        %v1028 = vpop.permute.xlu0 %1027
        %v1029 = vrot.slane %v1028, 7
        %vm1030 = vcmask 277504
        %v1031 = vsel %vm1030, %v1029, %v1028
        %v1033 = vmul.f32 %v1026, %v1031
        %1035 = vrot.lane.b32.xlu0 %v1033, 94
        %v1036 = vpop.permute.xlu0 %1035
        %v1037 = vrot.slane %v1036, 1
        %vm1038 = vcmask 769024
        %v1039 = vsel %vm1038, %v1036, %v1037
        %v1041 = vadd.f32 %v1019, %v1039
        %s1042 = sld [smem:[#allocation10 + $0x11]]
        %v1043 = vstv %s1042
        %v1044 = vmul.f32 %v1043, %v685
        %s1045 = sld [smem:[#allocation10 + $0x91]]
        %v1046 = vstv %s1045
        %v1047 = vmul.f32 %v1046, %v689
        %v1048 = vadd.f32 %v1044, %v1047
        %1049 = vrot.lane.b32.xlu0 %v663, 35
        %v1050 = vpop.permute.xlu0 %1049
        %v1051 = vrot.slane %v1050, 7
        %vm1052 = vcmask 285696
        %v1053 = vsel %vm1052, %v1051, %v1050
        %v1055 = vmul.f32 %v1048, %v1053
        %1057 = vrot.lane.b32.xlu0 %v1055, 93
        %v1058 = vpop.permute.xlu0 %1057
        %v1059 = vrot.slane %v1058, 1
        %vm1060 = vcmask 760832
        %v1061 = vsel %vm1060, %v1058, %v1059
        %v1063 = vadd.f32 %v1041, %v1061
        %s1064 = sld [smem:[#allocation10 + $0x12]]
        %v1065 = vstv %s1064
        %v1066 = vmul.f32 %v1065, %v685
        %s1067 = sld [smem:[#allocation10 + $0x92]]
        %v1068 = vstv %s1067
        %v1069 = vmul.f32 %v1068, %v689
        %v1070 = vadd.f32 %v1066, %v1069
        %1071 = vrot.lane.b32.xlu0 %v665, 36
        %v1072 = vpop.permute.xlu0 %1071
        %v1073 = vrot.slane %v1072, 7
        %vm1074 = vcmask 293888
        %v1075 = vsel %vm1074, %v1073, %v1072
        %v1077 = vmul.f32 %v1070, %v1075
        %1079 = vrot.lane.b32.xlu0 %v1077, 92
        %v1080 = vpop.permute.xlu0 %1079
        %v1081 = vrot.slane %v1080, 1
        %vm1082 = vcmask 752640
        %v1083 = vsel %vm1082, %v1080, %v1081
        %v1085 = vadd.f32 %v1063, %v1083
        %s1086 = sld [smem:[#allocation10 + $0x13]]
        %v1087 = vstv %s1086
        %v1088 = vmul.f32 %v1087, %v685
        %s1089 = sld [smem:[#allocation10 + $0x93]]
        %v1090 = vstv %s1089
        %v1091 = vmul.f32 %v1090, %v689
        %v1092 = vadd.f32 %v1088, %v1091
        %1093 = vrot.lane.b32.xlu0 %v667, 37
        %v1094 = vpop.permute.xlu0 %1093
        %v1095 = vrot.slane %v1094, 7
        %vm1096 = vcmask 302080
        %v1097 = vsel %vm1096, %v1095, %v1094
        %v1099 = vmul.f32 %v1092, %v1097
        %1101 = vrot.lane.b32.xlu0 %v1099, 91
        %v1102 = vpop.permute.xlu0 %1101
        %v1103 = vrot.slane %v1102, 1
        %vm1104 = vcmask 744448
        %v1105 = vsel %vm1104, %v1102, %v1103
        %v1107 = vadd.f32 %v1085, %v1105
        %s1108 = sld [smem:[#allocation10 + $0x14]]
        %v1109 = vstv %s1108
        %v1110 = vmul.f32 %v1109, %v685
        %s1111 = sld [smem:[#allocation10 + $0x94]]
        %v1112 = vstv %s1111
        %v1113 = vmul.f32 %v1112, %v689
        %v1114 = vadd.f32 %v1110, %v1113
        %1115 = vrot.lane.b32.xlu0 %v669, 38
        %v1116 = vpop.permute.xlu0 %1115
        %v1117 = vrot.slane %v1116, 7
        %vm1118 = vcmask 310272
        %v1119 = vsel %vm1118, %v1117, %v1116
        %v1121 = vmul.f32 %v1114, %v1119
        %1123 = vrot.lane.b32.xlu0 %v1121, 90
        %v1124 = vpop.permute.xlu0 %1123
        %v1125 = vrot.slane %v1124, 1
        %vm1126 = vcmask 736256
        %v1127 = vsel %vm1126, %v1124, %v1125
        %v1129 = vadd.f32 %v1107, %v1127
        %s1130 = sld [smem:[#allocation10 + $0x15]]
        %v1131 = vstv %s1130
        %v1132 = vmul.f32 %v1131, %v685
        %s1133 = sld [smem:[#allocation10 + $0x95]]
        %v1134 = vstv %s1133
        %v1135 = vmul.f32 %v1134, %v689
        %v1136 = vadd.f32 %v1132, %v1135
        %1137 = vrot.lane.b32.xlu0 %v657, 48
        %v1138 = vpop.permute.xlu0 %1137
        %v1139 = vrot.slane %v1138, 7
        %vm1140 = vcmask 392192
        %v1141 = vsel %vm1140, %v1139, %v1138
        %v1143 = vmul.f32 %v1136, %v1141
        %1145 = vrot.lane.b32.xlu0 %v1143, 80
        %v1146 = vpop.permute.xlu0 %1145
        %v1147 = vrot.slane %v1146, 1
        %vm1148 = vcmask 654336
        %v1149 = vsel %vm1148, %v1146, %v1147
        %v1151 = vadd.f32 %v1129, %v1149
        %s1152 = sld [smem:[#allocation10 + $0x16]]
        %v1153 = vstv %s1152
        %v1154 = vmul.f32 %v1153, %v685
        %s1155 = sld [smem:[#allocation10 + $0x96]]
        %v1156 = vstv %s1155
        %v1157 = vmul.f32 %v1156, %v689
        %v1158 = vadd.f32 %v1154, %v1157
        %1159 = vrot.lane.b32.xlu0 %v659, 49
        %v1160 = vpop.permute.xlu0 %1159
        %v1161 = vrot.slane %v1160, 7
        %vm1162 = vcmask 400384
        %v1163 = vsel %vm1162, %v1161, %v1160
        %v1165 = vmul.f32 %v1158, %v1163
        %1167 = vrot.lane.b32.xlu0 %v1165, 79
        %v1168 = vpop.permute.xlu0 %1167
        %v1169 = vrot.slane %v1168, 1
        %vm1170 = vcmask 646144
        %v1171 = vsel %vm1170, %v1168, %v1169
        %v1173 = vadd.f32 %v1151, %v1171
        %s1174 = sld [smem:[#allocation10 + $0x17]]
        %v1175 = vstv %s1174
        %v1176 = vmul.f32 %v1175, %v685
        %s1177 = sld [smem:[#allocation10 + $0x97]]
        %v1178 = vstv %s1177
        %v1179 = vmul.f32 %v1178, %v689
        %v1180 = vadd.f32 %v1176, %v1179
        %1181 = vrot.lane.b32.xlu0 %v661, 50
        %v1182 = vpop.permute.xlu0 %1181
        %v1183 = vrot.slane %v1182, 7
        %vm1184 = vcmask 408576
        %v1185 = vsel %vm1184, %v1183, %v1182
        %v1187 = vmul.f32 %v1180, %v1185
        %1189 = vrot.lane.b32.xlu0 %v1187, 78
        %v1190 = vpop.permute.xlu0 %1189
        %v1191 = vrot.slane %v1190, 1
        %vm1192 = vcmask 637952
        %v1193 = vsel %vm1192, %v1190, %v1191
        %v1195 = vadd.f32 %v1173, %v1193
        %s1196 = sld [smem:[#allocation10 + $0x18]]
        %v1197 = vstv %s1196
        %v1198 = vmul.f32 %v1197, %v685
        %s1199 = sld [smem:[#allocation10 + $0x98]]
        %v1200 = vstv %s1199
        %v1201 = vmul.f32 %v1200, %v689
        %v1202 = vadd.f32 %v1198, %v1201
        %1203 = vrot.lane.b32.xlu0 %v663, 51
        %v1204 = vpop.permute.xlu0 %1203
        %v1205 = vrot.slane %v1204, 7
        %v1206 = vsel %vm412, %v1205, %v1204
        %v1208 = vmul.f32 %v1202, %v1206
        %1210 = vrot.lane.b32.xlu0 %v1208, 77
        %v1211 = vpop.permute.xlu0 %1210
        %v1212 = vrot.slane %v1211, 1
        %vm1213 = vcmask 629760
        %v1214 = vsel %vm1213, %v1211, %v1212
        %v1216 = vadd.f32 %v1195, %v1214
        %s1217 = sld [smem:[#allocation10 + $0x19]]
        %v1218 = vstv %s1217
        %v1219 = vmul.f32 %v1218, %v685
        %s1220 = sld [smem:[#allocation10 + $0x99]]
        %v1221 = vstv %s1220
        %v1222 = vmul.f32 %v1221, %v689
        %v1223 = vadd.f32 %v1219, %v1222
        %1224 = vrot.lane.b32.xlu0 %v665, 52
        %v1225 = vpop.permute.xlu0 %1224
        %v1226 = vrot.slane %v1225, 7
        %vm1227 = vcmask 424960
        %v1228 = vsel %vm1227, %v1226, %v1225
        %v1230 = vmul.f32 %v1223, %v1228
        %1232 = vrot.lane.b32.xlu0 %v1230, 76
        %v1233 = vpop.permute.xlu0 %1232
        %v1234 = vrot.slane %v1233, 1
        %vm1235 = vcmask 621568
        %v1236 = vsel %vm1235, %v1233, %v1234
        %v1238 = vadd.f32 %v1216, %v1236
        %s1239 = sld [smem:[#allocation10 + $0x1a]]
        %v1240 = vstv %s1239
        %v1241 = vmul.f32 %v1240, %v685
        %s1242 = sld [smem:[#allocation10 + $0x9a]]
        %v1243 = vstv %s1242
        %v1244 = vmul.f32 %v1243, %v689
        %v1245 = vadd.f32 %v1241, %v1244
        %1246 = vrot.lane.b32.xlu0 %v667, 53
        %v1247 = vpop.permute.xlu0 %1246
        %v1248 = vrot.slane %v1247, 7
        %vm1249 = vcmask 433152
        %v1250 = vsel %vm1249, %v1248, %v1247
        %v1252 = vmul.f32 %v1245, %v1250
        %1254 = vrot.lane.b32.xlu0 %v1252, 75
        %v1255 = vpop.permute.xlu0 %1254
        %v1256 = vrot.slane %v1255, 1
        %vm1257 = vcmask 613376
        %v1258 = vsel %vm1257, %v1255, %v1256
        %v1260 = vadd.f32 %v1238, %v1258
        %s1261 = sld [smem:[#allocation10 + $0x1b]]
        %v1262 = vstv %s1261
        %v1263 = vmul.f32 %v1262, %v685
        %s1264 = sld [smem:[#allocation10 + $0x9b]]
        %v1265 = vstv %s1264
        %v1266 = vmul.f32 %v1265, %v689
        %v1267 = vadd.f32 %v1263, %v1266
        %1268 = vrot.lane.b32.xlu0 %v669, 54
        %v1269 = vpop.permute.xlu0 %1268
        %v1270 = vrot.slane %v1269, 7
        %vm1271 = vcmask 441344
        %v1272 = vsel %vm1271, %v1270, %v1269
        %v1274 = vmul.f32 %v1267, %v1272
        %1276 = vrot.lane.b32.xlu0 %v1274, 74
        %v1277 = vpop.permute.xlu0 %1276
        %v1278 = vrot.slane %v1277, 1
        %vm1279 = vcmask 605184
        %v1280 = vsel %vm1279, %v1277, %v1278
        %v1282 = vadd.f32 %v1260, %v1280
        %s1283 = sld [smem:[#allocation10 + $0x1c]]
        %v1284 = vstv %s1283
        %v1285 = vmul.f32 %v1284, %v685
        %s1286 = sld [smem:[#allocation10 + $0x9c]]
        %v1287 = vstv %s1286
        %v1288 = vmul.f32 %v1287, %v689
        %v1289 = vadd.f32 %v1285, %v1288
        %1290 = vrot.lane.b32.xlu0 %v657, 64
        %v1291 = vpop.permute.xlu0 %1290
        %v1292 = vrot.slane %v1291, 7
        %vm1293 = vcmask 523264
        %v1294 = vsel %vm1293, %v1292, %v1291
        %v1296 = vmul.f32 %v1289, %v1294
        %1298 = vrot.lane.b32.xlu0 %v1296, 64
        %v1299 = vpop.permute.xlu0 %1298
        %v1300 = vrot.slane %v1299, 1
        %v1301 = vsel %vm1293, %v1299, %v1300
        %v1303 = vadd.f32 %v1282, %v1301
        %s1304 = sld [smem:[#allocation10 + $0x1d]]
        %v1305 = vstv %s1304
        %v1306 = vmul.f32 %v1305, %v685
        %s1307 = sld [smem:[#allocation10 + $0x9d]]
        %v1308 = vstv %s1307
        %v1309 = vmul.f32 %v1308, %v689
        %v1310 = vadd.f32 %v1306, %v1309
        %1311 = vrot.lane.b32.xlu0 %v659, 65
        %v1312 = vpop.permute.xlu0 %1311
        %v1313 = vrot.slane %v1312, 7
        %vm1314 = vcmask 531456
        %v1315 = vsel %vm1314, %v1313, %v1312
        %v1317 = vmul.f32 %v1310, %v1315
        %1319 = vrot.lane.b32.xlu0 %v1317, 63
        %v1320 = vpop.permute.xlu0 %1319
        %v1321 = vrot.slane %v1320, 1
        %vm1322 = vcmask 515072
        %v1323 = vsel %vm1322, %v1320, %v1321
        %v1325 = vadd.f32 %v1303, %v1323
        %s1326 = sld [smem:[#allocation10 + $0x1e]]
        %v1327 = vstv %s1326
        %v1328 = vmul.f32 %v1327, %v685
        %s1329 = sld [smem:[#allocation10 + $0x9e]]
        %v1330 = vstv %s1329
        %v1331 = vmul.f32 %v1330, %v689
        %v1332 = vadd.f32 %v1328, %v1331
        %1333 = vrot.lane.b32.xlu0 %v661, 66
        %v1334 = vpop.permute.xlu0 %1333
        %v1335 = vrot.slane %v1334, 7
        %vm1336 = vcmask 539648
        %v1337 = vsel %vm1336, %v1335, %v1334
        %v1339 = vmul.f32 %v1332, %v1337
        %1341 = vrot.lane.b32.xlu0 %v1339, 62
        %v1342 = vpop.permute.xlu0 %1341
        %v1343 = vrot.slane %v1342, 1
        %vm1344 = vcmask 506880
        %v1345 = vsel %vm1344, %v1342, %v1343
        %v1347 = vadd.f32 %v1325, %v1345
        %s1348 = sld [smem:[#allocation10 + $0x1f]]
        %v1349 = vstv %s1348
        %v1350 = vmul.f32 %v1349, %v685
        %s1351 = sld [smem:[#allocation10 + $0x9f]]
        %v1352 = vstv %s1351
        %v1353 = vmul.f32 %v1352, %v689
        %v1354 = vadd.f32 %v1350, %v1353
        %1355 = vrot.lane.b32.xlu0 %v663, 67
        %v1356 = vpop.permute.xlu0 %1355
        %v1357 = vrot.slane %v1356, 7
        %vm1358 = vcmask 547840
        %v1359 = vsel %vm1358, %v1357, %v1356
        %v1361 = vmul.f32 %v1354, %v1359
        %1363 = vrot.lane.b32.xlu0 %v1361, 61
        %v1364 = vpop.permute.xlu0 %1363
        %v1365 = vrot.slane %v1364, 1
        %vm1366 = vcmask 498688
        %v1367 = vsel %vm1366, %v1364, %v1365
        %v1369 = vadd.f32 %v1347, %v1367
        %s1370 = sld [smem:[#allocation10 + $0x20]]
        %v1371 = vstv %s1370
        %v1372 = vmul.f32 %v1371, %v685
        %s1373 = sld [smem:[#allocation10 + $0xa0]]
        %v1374 = vstv %s1373
        %v1375 = vmul.f32 %v1374, %v689
        %v1376 = vadd.f32 %v1372, %v1375
        %1377 = vrot.lane.b32.xlu0 %v665, 68
        %v1378 = vpop.permute.xlu0 %1377
        %v1379 = vrot.slane %v1378, 7
        %vm1380 = vcmask 556032
        %v1381 = vsel %vm1380, %v1379, %v1378
        %v1383 = vmul.f32 %v1376, %v1381
        %1385 = vrot.lane.b32.xlu0 %v1383, 60
        %v1386 = vpop.permute.xlu0 %1385
        %v1387 = vrot.slane %v1386, 1
        %vm1388 = vcmask 490496
        %v1389 = vsel %vm1388, %v1386, %v1387
        %v1391 = vadd.f32 %v1369, %v1389
        %s1392 = sld [smem:[#allocation10 + $0x21]]
        %v1393 = vstv %s1392
        %v1394 = vmul.f32 %v1393, %v685
        %s1395 = sld [smem:[#allocation10 + $0xa1]]
        %v1396 = vstv %s1395
        %v1397 = vmul.f32 %v1396, %v689
        %v1398 = vadd.f32 %v1394, %v1397
        %1399 = vrot.lane.b32.xlu0 %v667, 69
        %v1400 = vpop.permute.xlu0 %1399
        %v1401 = vrot.slane %v1400, 7
        %vm1402 = vcmask 564224
        %v1403 = vsel %vm1402, %v1401, %v1400
        %v1405 = vmul.f32 %v1398, %v1403
        %1407 = vrot.lane.b32.xlu0 %v1405, 59
        %v1408 = vpop.permute.xlu0 %1407
        %v1409 = vrot.slane %v1408, 1
        %vm1410 = vcmask 482304
        %v1411 = vsel %vm1410, %v1408, %v1409
        %v1413 = vadd.f32 %v1391, %v1411
        %s1414 = sld [smem:[#allocation10 + $0x22]]
        %v1415 = vstv %s1414
        %v1416 = vmul.f32 %v1415, %v685
        %s1417 = sld [smem:[#allocation10 + $0xa2]]
        %v1418 = vstv %s1417
        %v1419 = vmul.f32 %v1418, %v689
        %v1420 = vadd.f32 %v1416, %v1419
        %1421 = vrot.lane.b32.xlu0 %v669, 70
        %v1422 = vpop.permute.xlu0 %1421
        %v1423 = vrot.slane %v1422, 7
        %vm1424 = vcmask 572416
        %v1425 = vsel %vm1424, %v1423, %v1422
        %v1427 = vmul.f32 %v1420, %v1425
        %1429 = vrot.lane.b32.xlu0 %v1427, 58
        %v1430 = vpop.permute.xlu0 %1429
        %v1431 = vrot.slane %v1430, 1
        %vm1432 = vcmask 474112
        %v1433 = vsel %vm1432, %v1430, %v1431
        %v1435 = vadd.f32 %v1413, %v1433
        %s1436 = sld [smem:[#allocation10 + $0x23]]
        %v1437 = vstv %s1436
        %v1438 = vmul.f32 %v1437, %v685
        %s1439 = sld [smem:[#allocation10 + $0xa3]]
        %v1440 = vstv %s1439
        %v1441 = vmul.f32 %v1440, %v689
        %v1442 = vadd.f32 %v1438, %v1441
        %1443 = vrot.lane.b32.xlu0 %v657, 80
        %v1444 = vpop.permute.xlu0 %1443
        %v1445 = vrot.slane %v1444, 7
        %v1446 = vsel %vm1148, %v1445, %v1444
        %v1448 = vmul.f32 %v1442, %v1446
        %1450 = vrot.lane.b32.xlu0 %v1448, 48
        %v1451 = vpop.permute.xlu0 %1450
        %v1452 = vrot.slane %v1451, 1
        %v1453 = vsel %vm1140, %v1451, %v1452
        %v1455 = vadd.f32 %v1435, %v1453
        %s1456 = sld [smem:[#allocation10 + $0x24]]
        %v1457 = vstv %s1456
        %v1458 = vmul.f32 %v1457, %v685
        %s1459 = sld [smem:[#allocation10 + $0xa4]]
        %v1460 = vstv %s1459
        %v1461 = vmul.f32 %v1460, %v689
        %v1462 = vadd.f32 %v1458, %v1461
        %1463 = vrot.lane.b32.xlu0 %v659, 81
        %v1464 = vpop.permute.xlu0 %1463
        %v1465 = vrot.slane %v1464, 7
        %vm1466 = vcmask 662528
        %v1467 = vsel %vm1466, %v1465, %v1464
        %v1469 = vmul.f32 %v1462, %v1467
        %1471 = vrot.lane.b32.xlu0 %v1469, 47
        %v1472 = vpop.permute.xlu0 %1471
        %v1473 = vrot.slane %v1472, 1
        %vm1474 = vcmask 384000
        %v1475 = vsel %vm1474, %v1472, %v1473
        %v1477 = vadd.f32 %v1455, %v1475
        %s1478 = sld [smem:[#allocation10 + $0x25]]
        %v1479 = vstv %s1478
        %v1480 = vmul.f32 %v1479, %v685
        %s1481 = sld [smem:[#allocation10 + $0xa5]]
        %v1482 = vstv %s1481
        %v1483 = vmul.f32 %v1482, %v689
        %v1484 = vadd.f32 %v1480, %v1483
        %1485 = vrot.lane.b32.xlu0 %v661, 82
        %v1486 = vpop.permute.xlu0 %1485
        %v1487 = vrot.slane %v1486, 7
        %vm1488 = vcmask 670720
        %v1489 = vsel %vm1488, %v1487, %v1486
        %v1491 = vmul.f32 %v1484, %v1489
        %1493 = vrot.lane.b32.xlu0 %v1491, 46
        %v1494 = vpop.permute.xlu0 %1493
        %v1495 = vrot.slane %v1494, 1
        %vm1496 = vcmask 375808
        %v1497 = vsel %vm1496, %v1494, %v1495
        %v1499 = vadd.f32 %v1477, %v1497
        %s1500 = sld [smem:[#allocation10 + $0x26]]
        %v1501 = vstv %s1500
        %v1502 = vmul.f32 %v1501, %v685
        %s1503 = sld [smem:[#allocation10 + $0xa6]]
        %v1504 = vstv %s1503
        %v1505 = vmul.f32 %v1504, %v689
        %v1506 = vadd.f32 %v1502, %v1505
        %1507 = vrot.lane.b32.xlu0 %v663, 83
        %v1508 = vpop.permute.xlu0 %1507
        %v1509 = vrot.slane %v1508, 7
        %vm1510 = vcmask 678912
        %v1511 = vsel %vm1510, %v1509, %v1508
        %v1513 = vmul.f32 %v1506, %v1511
        %1515 = vrot.lane.b32.xlu0 %v1513, 45
        %v1516 = vpop.permute.xlu0 %1515
        %v1517 = vrot.slane %v1516, 1
        %vm1518 = vcmask 367616
        %v1519 = vsel %vm1518, %v1516, %v1517
        %v1521 = vadd.f32 %v1499, %v1519
        %s1522 = sld [smem:[#allocation10 + $0x27]]
        %v1523 = vstv %s1522
        %v1524 = vmul.f32 %v1523, %v685
        %s1525 = sld [smem:[#allocation10 + $0xa7]]
        %v1526 = vstv %s1525
        %v1527 = vmul.f32 %v1526, %v689
        %v1528 = vadd.f32 %v1524, %v1527
        %1529 = vrot.lane.b32.xlu0 %v665, 84
        %v1530 = vpop.permute.xlu0 %1529
        %v1531 = vrot.slane %v1530, 7
        %vm1532 = vcmask 687104
        %v1533 = vsel %vm1532, %v1531, %v1530
        %v1535 = vmul.f32 %v1528, %v1533
        %1537 = vrot.lane.b32.xlu0 %v1535, 44
        %v1538 = vpop.permute.xlu0 %1537
        %v1539 = vrot.slane %v1538, 1
        %vm1540 = vcmask 359424
        %v1541 = vsel %vm1540, %v1538, %v1539
        %v1543 = vadd.f32 %v1521, %v1541
        %s1544 = sld [smem:[#allocation10 + $0x28]]
        %v1545 = vstv %s1544
        %v1546 = vmul.f32 %v1545, %v685
        %s1547 = sld [smem:[#allocation10 + $0xa8]]
        %v1548 = vstv %s1547
        %v1549 = vmul.f32 %v1548, %v689
        %v1550 = vadd.f32 %v1546, %v1549
        %1551 = vrot.lane.b32.xlu0 %v667, 85
        %v1552 = vpop.permute.xlu0 %1551
        %v1553 = vrot.slane %v1552, 7
        %vm1554 = vcmask 695296
        %v1555 = vsel %vm1554, %v1553, %v1552
        %v1557 = vmul.f32 %v1550, %v1555
        %1559 = vrot.lane.b32.xlu0 %v1557, 43
        %v1560 = vpop.permute.xlu0 %1559
        %v1561 = vrot.slane %v1560, 1
        %vm1562 = vcmask 351232
        %v1563 = vsel %vm1562, %v1560, %v1561
        %v1565 = vadd.f32 %v1543, %v1563
        %s1566 = sld [smem:[#allocation10 + $0x29]]
        %v1567 = vstv %s1566
        %v1568 = vmul.f32 %v1567, %v685
        %s1569 = sld [smem:[#allocation10 + $0xa9]]
        %v1570 = vstv %s1569
        %v1571 = vmul.f32 %v1570, %v689
        %v1572 = vadd.f32 %v1568, %v1571
        %1573 = vrot.lane.b32.xlu0 %v669, 86
        %v1574 = vpop.permute.xlu0 %1573
        %v1575 = vrot.slane %v1574, 7
        %vm1576 = vcmask 703488
        %v1577 = vsel %vm1576, %v1575, %v1574
        %v1579 = vmul.f32 %v1572, %v1577
        %1581 = vrot.lane.b32.xlu0 %v1579, 42
        %v1582 = vpop.permute.xlu0 %1581
        %v1583 = vrot.slane %v1582, 1
        %vm1584 = vcmask 343040
        %v1585 = vsel %vm1584, %v1582, %v1583
        %v1587 = vadd.f32 %v1565, %v1585
        %s1588 = sld [smem:[#allocation10 + $0x2a]]
        %v1589 = vstv %s1588
        %v1590 = vmul.f32 %v1589, %v685
        %s1591 = sld [smem:[#allocation10 + $0xaa]]
        %v1592 = vstv %s1591
        %v1593 = vmul.f32 %v1592, %v689
        %v1594 = vadd.f32 %v1590, %v1593
        %1595 = vrot.lane.b32.xlu0 %v657, 96
        %v1596 = vpop.permute.xlu0 %1595
        %v1597 = vrot.slane %v1596, 7
        %v1598 = vsel %vm994, %v1597, %v1596
        %v1600 = vmul.f32 %v1594, %v1598
        %1602 = vrot.lane.b32.xlu0 %v1600, 32
        %v1603 = vpop.permute.xlu0 %1602
        %v1604 = vrot.slane %v1603, 1
        %v1605 = vsel %vm986, %v1603, %v1604
        %v1607 = vadd.f32 %v1587, %v1605
        %s1608 = sld [smem:[#allocation10 + $0x2b]]
        %v1609 = vstv %s1608
        %v1610 = vmul.f32 %v1609, %v685
        %s1611 = sld [smem:[#allocation10 + $0xab]]
        %v1612 = vstv %s1611
        %v1613 = vmul.f32 %v1612, %v689
        %v1614 = vadd.f32 %v1610, %v1613
        %1615 = vrot.lane.b32.xlu0 %v659, 97
        %v1616 = vpop.permute.xlu0 %1615
        %v1617 = vrot.slane %v1616, 7
        %vm1618 = vcmask 793600
        %v1619 = vsel %vm1618, %v1617, %v1616
        %v1621 = vmul.f32 %v1614, %v1619
        %1623 = vrot.lane.b32.xlu0 %v1621, 31
        %v1624 = vpop.permute.xlu0 %1623
        %v1625 = vrot.slane %v1624, 1
        %vm1626 = vcmask 252928
        %v1627 = vsel %vm1626, %v1624, %v1625
        %v1629 = vadd.f32 %v1607, %v1627
        %s1630 = sld [smem:[#allocation10 + $0x2c]]
        %v1631 = vstv %s1630
        %v1632 = vmul.f32 %v1631, %v685
        %s1633 = sld [smem:[#allocation10 + $0xac]]
        %v1634 = vstv %s1633
        %v1635 = vmul.f32 %v1634, %v689
        %v1636 = vadd.f32 %v1632, %v1635
        %1637 = vrot.lane.b32.xlu0 %v661, 98
        %v1638 = vpop.permute.xlu0 %1637
        %v1639 = vrot.slane %v1638, 7
        %vm1640 = vcmask 801792
        %v1641 = vsel %vm1640, %v1639, %v1638
        %v1643 = vmul.f32 %v1636, %v1641
        %1645 = vrot.lane.b32.xlu0 %v1643, 30
        %v1646 = vpop.permute.xlu0 %1645
        %v1647 = vrot.slane %v1646, 1
        %vm1648 = vcmask 244736
        %v1649 = vsel %vm1648, %v1646, %v1647
        %v1651 = vadd.f32 %v1629, %v1649
        %s1652 = sld [smem:[#allocation10 + $0x2d]]
        %v1653 = vstv %s1652
        %v1654 = vmul.f32 %v1653, %v685
        %s1655 = sld [smem:[#allocation10 + $0xad]]
        %v1656 = vstv %s1655
        %v1657 = vmul.f32 %v1656, %v689
        %v1658 = vadd.f32 %v1654, %v1657
        %1659 = vrot.lane.b32.xlu0 %v663, 99
        %v1660 = vpop.permute.xlu0 %1659
        %v1661 = vrot.slane %v1660, 7
        %vm1662 = vcmask 809984
        %v1663 = vsel %vm1662, %v1661, %v1660
        %v1665 = vmul.f32 %v1658, %v1663
        %1667 = vrot.lane.b32.xlu0 %v1665, 29
        %v1668 = vpop.permute.xlu0 %1667
        %v1669 = vrot.slane %v1668, 1
        %vm1670 = vcmask 236544
        %v1671 = vsel %vm1670, %v1668, %v1669
        %v1673 = vadd.f32 %v1651, %v1671
        %s1674 = sld [smem:[#allocation10 + $0x2e]]
        %v1675 = vstv %s1674
        %v1676 = vmul.f32 %v1675, %v685
        %s1677 = sld [smem:[#allocation10 + $0xae]]
        %v1678 = vstv %s1677
        %v1679 = vmul.f32 %v1678, %v689
        %v1680 = vadd.f32 %v1676, %v1679
        %1681 = vrot.lane.b32.xlu0 %v665, 100
        %v1682 = vpop.permute.xlu0 %1681
        %v1683 = vrot.slane %v1682, 7
        %vm1684 = vcmask 818176
        %v1685 = vsel %vm1684, %v1683, %v1682
        %v1687 = vmul.f32 %v1680, %v1685
        %1689 = vrot.lane.b32.xlu0 %v1687, 28
        %v1690 = vpop.permute.xlu0 %1689
        %v1691 = vrot.slane %v1690, 1
        %vm1692 = vcmask 228352
        %v1693 = vsel %vm1692, %v1690, %v1691
        %v1695 = vadd.f32 %v1673, %v1693
        %s1696 = sld [smem:[#allocation10 + $0x2f]]
        %v1697 = vstv %s1696
        %v1698 = vmul.f32 %v1697, %v685
        %s1699 = sld [smem:[#allocation10 + $0xaf]]
        %v1700 = vstv %s1699
        %v1701 = vmul.f32 %v1700, %v689
        %v1702 = vadd.f32 %v1698, %v1701
        %1703 = vrot.lane.b32.xlu0 %v667, 101
        %v1704 = vpop.permute.xlu0 %1703
        %v1705 = vrot.slane %v1704, 7
        %vm1706 = vcmask 826368
        %v1707 = vsel %vm1706, %v1705, %v1704
        %v1709 = vmul.f32 %v1702, %v1707
        %1711 = vrot.lane.b32.xlu0 %v1709, 27
        %v1712 = vpop.permute.xlu0 %1711
        %v1713 = vrot.slane %v1712, 1
        %vm1714 = vcmask 220160
        %v1715 = vsel %vm1714, %v1712, %v1713
        %v1717 = vadd.f32 %v1695, %v1715
        %s1718 = sld [smem:[#allocation10 + $0x30]]
        %v1719 = vstv %s1718
        %v1720 = vmul.f32 %v1719, %v685
        %s1721 = sld [smem:[#allocation10 + $0xb0]]
        %v1722 = vstv %s1721
        %v1723 = vmul.f32 %v1722, %v689
        %v1724 = vadd.f32 %v1720, %v1723
        %1725 = vrot.lane.b32.xlu0 %v669, 102
        %v1726 = vpop.permute.xlu0 %1725
        %v1727 = vrot.slane %v1726, 7
        %vm1728 = vcmask 834560
        %v1729 = vsel %vm1728, %v1727, %v1726
        %v1731 = vmul.f32 %v1724, %v1729
        %1733 = vrot.lane.b32.xlu0 %v1731, 26
        %v1734 = vpop.permute.xlu0 %1733
        %v1735 = vrot.slane %v1734, 1
        %vm1736 = vcmask 211968
        %v1737 = vsel %vm1736, %v1734, %v1735
        %v1739 = vadd.f32 %v1717, %v1737
        %v1740 = vmul.f32 %v1739, 0.5
        %v1741 = vtanh.pop %v1740
        %v1742 = vadd.f32 %v1741, 1.0
        %v1743 = vmul.f32 %v1742, 0.5
        %v1744 = vld [vmem:[%s301] sm:$0xff]
        %v1745 = vld [vmem:[%s301 + $0x8] sm:$0xff]
        %v1746 = vld [vmem:[%s301 + $0x10] sm:$0xff]
        %v1747 = vld [vmem:[%s301 + $0x18] sm:$0xff]
        %1749 = vset.pattern.permute.xlu0 0
        %1750 = vperm.xlu0 %1749, %v655
        %v1751 = vpop.permute.xlu0 %1750
        %1754 = vset.pattern.permute.xlu0 0
        %1755 = vperm.xlu0 %1754, %v656
        %v1756 = vpop.permute.xlu0 %1755
        %v1758 = vmul.f32 %v1744, %v1751
        %v1759 = vmul.f32 %v1745, %v1751
        %v1760 = vmul.f32 %v1746, %v1756
        %v1761 = vmul.f32 %v1747, %v1756
        %v1762 = vmul.f32 %v1758, 0.5
        %v1763 = vmul.f32 %v1759, 0.5
        %v1764 = vmul.f32 %v1760, 0.5
        %v1765 = vmul.f32 %v1761, 0.5
        %v1766 = vtanh.pop %v1762
        %v1767 = vtanh.pop %v1763
        %v1768 = vtanh.pop %v1764
        %v1769 = vtanh.pop %v1765
        %v1770 = vadd.f32 %v1766, 1.0
        %v1771 = vadd.f32 %v1767, 1.0
        %v1772 = vadd.f32 %v1768, 1.0
        %v1773 = vadd.f32 %v1769, 1.0
        %v1774 = vmul.f32 %v1770, 0.5
        %v1775 = vmul.f32 %v1771, 0.5
        %v1776 = vmul.f32 %v1772, 0.5
        %v1777 = vmul.f32 %v1773, 0.5
        %v1779 = vlaneseq
        %v1780 = vshrl.u32 %v1779, 7
        %v1781 = vsub.s32 0, %v1780
        %v1782 = vrot.slane %v1743, %v1781
        %v1783 = vlaneseq
        %v1784 = vshrl.u32 %v1783, 7
        %v1785 = vsub.s32 1, %v1784
        %v1786 = vrot.slane %v1743, %v1785
        %v1789 = vmul.f32 %v1744, %v1782
        %v1790 = vmul.f32 %v1745, %v1786
        %v1791 = vmul.f32 %v1746, %v1782
        %v1792 = vmul.f32 %v1747, %v1786
        %v1793 = vmul.f32 %v1789, 0.5
        %v1794 = vmul.f32 %v1790, 0.5
        %v1795 = vmul.f32 %v1791, 0.5
        %v1796 = vmul.f32 %v1792, 0.5
        %v1797 = vtanh.pop %v1793
        %v1798 = vtanh.pop %v1794
        %v1799 = vtanh.pop %v1795
        %v1800 = vtanh.pop %v1796
        %v1801 = vadd.f32 %v1797, 1.0
        %v1802 = vadd.f32 %v1798, 1.0
        %v1803 = vadd.f32 %v1799, 1.0
        %v1804 = vadd.f32 %v1800, 1.0
        %v1805 = vmul.f32 %v1801, 0.5
        %v1806 = vmul.f32 %v1802, 0.5
        %v1807 = vmul.f32 %v1803, 0.5
        %v1808 = vmul.f32 %v1804, 0.5
        %v1809 = vmul.f32 %v1774, %v1805
        %v1810 = vmul.f32 %v1775, %v1806
        %v1811 = vmul.f32 %v1776, %v1807
        %v1812 = vmul.f32 %v1777, %v1808
        %1813 = vst [vmem:[%s338] sm:$0xff] %v1809
        %1814 = vst [vmem:[%s338 + $0x8] sm:$0xff] %v1810
        %1815 = vst [vmem:[%s338 + $0x10] sm:$0xff] %v1811
        %1816 = vst [vmem:[%s338 + $0x18] sm:$0xff] %v1812
        %s1817 = sand.u32 %s208, 1
        %s1818 = scalar_lea.sflag [#allocation8], %s1817
        %s1819 = sand.u32 %s208, 1
        %s1820 = smul.addr %s1819, 32
        %s1821 = scalar_lea.vmem [#allocation11], %s1820
        // Predicated region
        $region61: #{tpu_custom_call.1} parent=51 // pred_check
          %p1822 = pneg %p218
        $region62: #{tpu_custom_call.1} parent=51 // pred_check_branch
          %1824 = sbr.rel (%p1822) target = $region64
        $region63: #{tpu_custom_call.1} parent=51 // pred_region
          %s1826 = ssub.s32 512, 512
          %1827 = vsyncadd %s1818, %s1826
          %s1828 = smul.addr %s27, 4
          %s1829 = smul.addr %s1828, 128
          %s1830 = scalar_lea.hbm %s8, %s1829
          %s1831 = sshll.u32 %s1821, 4
          %s1832 = int_to_ptr.vmem [resolvable:$true] %s1831
          %1837 = dma.vmem_to_hbm [thread:$0]  %s1832, 512, %s1830, %s1818, 256, 256, 16
        $region64: #{tpu_custom_call.1} parent=51 // pred_fallthru
          _
      $region52: #{tpu_custom_call.1} parent=5 // pred_fallthru
        _
      %p1838 = scmp.le.s32.totalorder 2, %s22
      // Predicated region
      $region65: #{tpu_custom_call.1} parent=5 // pred_check
        %p1839 = pneg %p1838
      $region66: #{tpu_custom_call.1} parent=5 // pred_check_branch
        %1841 = sbr.rel (%p1839) target = $region68
      $region67: #{tpu_custom_call.1} parent=5 // pred_region
        %s1842 = ssub.s32 %s22, 2
        // Predicated region
        $region69: #{tpu_custom_call.1} parent=67 // pred_check
          %p1843 = pneg %p224
        $region70: #{tpu_custom_call.1} parent=67 // pred_check_branch
          %1845 = sbr.rel (%p1843) target = $region72
        $region71: #{tpu_custom_call.1} parent=67 // pred_region
          %s1846 = sand.u32 %s209, 1
          %s1847 = scalar_lea.sflag [#allocation8], %s1846
          %s1848 = sand.u32 %s209, 1
          %s1849 = smul.addr %s1848, 32
          %s1850 = scalar_lea.vmem [#allocation11], %s1849
          %1851 = dma.done %s1847, 512
        $region72: #{tpu_custom_call.1} parent=67 // pred_fallthru
          _
      $region68: #{tpu_custom_call.1} parent=5 // pred_fallthru
        _
    $region6: #{tpu_custom_call.1} parent=1 // loop_footer
      %s26 = sadd.s32 1, %s22
    $region7: #{tpu_custom_call.1} parent=1 // loop_footer_branch
      %21 = sbr.rel target = $region3
    $region8: #{tpu_custom_call.1} parent=1 // loop_exit
      _
    %1852 = vsyncpa [#allocation7], 1
    %s1853 = scalar_lea.sflag [#allocation7], 1
    %1854 = vsyncpa %s1853, 1
    %1855 = vsyncpa [#allocation8], 1
    %s1856 = scalar_lea.sflag [#allocation8], 1
    %1857 = vsyncpa %s1856, 1
    %1858 = vsyncpa [#allocation9], 1
    %s1859 = scalar_lea.sflag [#allocation9], 1
    %1860 = vsyncpa %s1859, 1

</llo_original>
